<compile_context>
chip_gen: v5e
topology: v5e:2x2
jax: 0.10.0
libtpu: 0.0.40
codegen_flags: <defaults>
</compile_context>

<pallas_src>
import functools

import jax
import jax.numpy as jnp
import numpy as np
from jax import lax
from jax.experimental import pallas as pl
from jax.experimental.pallas import tpu as pltpu


# ----------------------------------------------------------------------------
# Fused ResidualGroup kernel: one grid step == one batch element.
# ----------------------------------------------------------------------------
def _residual_group_kernel(x_ref, w1_ref, b1_ref, w2_ref, b2_ref,
                           cw1_ref, cb1_ref, cw2_ref, cb2_ref,
                           tw_ref, tb_ref, o_ref, *, H, W, C, Cr, L):
    HW = H * W

    # Column index (position inside an image row) of every flattened pixel.
    # Used to zero the lanes that would wrap across image rows for dx = +-1.
    col = lax.broadcasted_iota(jnp.int32, (1, HW), 1) % W
    valid_l = col >= 1           # pixel has a left  neighbour (dx = -1)
    valid_r = col < (W - 1)      # pixel has a right neighbour (dx = +1)

    zpad = jnp.zeros((C, W + 1), jnp.bfloat16)

    def conv3x3(a, wcat, brow, relu):
        # a: (C, HW) f32   wcat: (C_out, 9*C) bf16   brow: (C_out, 1) f32
        ap = jnp.concatenate([zpad, a.astype(jnp.bfloat16), zpad], axis=1)
        taps = []
        for kh in range(3):
            for kw in range(3):
                s = (kh - 1) * W + (kw - 1)
                sh = ap[:, W + 1 + s: W + 1 + s + HW]          # (C, HW) bf16
                if kw == 0:
                    sh = jnp.where(valid_l, sh, 0)
                elif kw == 2:
                    sh = jnp.where(valid_r, sh, 0)
                taps.append(sh)
        patches = jnp.concatenate(taps, axis=0)                # (9C, HW) bf16
        acc = jnp.dot(wcat, patches,
                      preferred_element_type=jnp.float32)      # (C_out, HW) f32
        acc = acc + brow
        if relu:
            acc = jnp.maximum(acc, 0.0)
        return acc

    res = x_ref[0]                                             # (C, HW) f32
    for l in range(L):                                         # unrolled
        y = conv3x3(res, w1_ref[l], b1_ref[l], relu=True)      # conv + ReLU
        y = conv3x3(y, w2_ref[l], b2_ref[l], relu=False)       # conv
        # ---- channel attention (fused, VPU/XLU only) ----
        pooled = jnp.mean(y, axis=1, keepdims=True)                    # (C, 1)
        t1 = jnp.sum(cw1_ref[l] * pooled, axis=0, keepdims=True)       # (1, Cr)
        hfc = jnp.maximum(t1 + cb1_ref[l], 0.0)
        t2 = jnp.sum(cw2_ref[l] * hfc, axis=1, keepdims=True)          # (C, 1)
        gate = jax.nn.sigmoid(t2 + cb2_ref[l])
        res = y * gate + res                                   # RCAB skip
    # tail conv of the group, fused with the group-level residual add
    out = conv3x3(res, tw_ref[...], tb_ref[...], relu=False) + x_ref[0]
    o_ref[...] = out.reshape(1, C, HW).astype(o_ref.dtype)


# ----------------------------------------------------------------------------
# Wrapper: weight packing + pallas_call.  Input/output are PyTorch-style NCHW.
# ----------------------------------------------------------------------------
def _im2col_weight(w):
    """(3,3,Cin,Cout) HWIO -> (Cout, 9*Cin) bf16, matching the kernel tap order."""
    kh, kw, cin, cout = w.shape
    assert (kh, kw) == (3, 3), "kernel only supports 3x3 convolutions"
    return jnp.transpose(w, (3, 0, 1, 2)).reshape(cout, 9 * cin).astype(jnp.bfloat16)


def residual_group_forward(x_nchw, params):
    """x_nchw: (N, C, H, W) float32 -> (N, C, H, W) float32."""
    N, C, H, W = x_nchw.shape
    HW = H * W
    rcab = params["rcab"]
    L = len(rcab)
    Cr = rcab[0]["ca_w1"].shape[1]

    w1c = jnp.stack([_im2col_weight(b["w1"]) for b in rcab])        # (L, C, 9C) bf16
    w2c = jnp.stack([_im2col_weight(b["w2"]) for b in rcab])        # (L, C, 9C) bf16
    b1s = jnp.stack([b["b1"].reshape(C, 1) for b in rcab])          # (L, C, 1)
    b2s = jnp.stack([b["b2"].reshape(C, 1) for b in rcab])          # (L, C, 1)
    cw1 = jnp.stack([b["ca_w1"] for b in rcab])                     # (L, C, Cr)
    cb1 = jnp.stack([b["ca_b1"].reshape(1, Cr) for b in rcab])      # (L, 1, Cr)
    cw2 = jnp.stack([b["ca_w2"].T for b in rcab])                   # (L, C, Cr)
    cb2 = jnp.stack([b["ca_b2"].reshape(C, 1) for b in rcab])       # (L, C, 1)
    twc = _im2col_weight(params["tail_w"])                          # (C, 9C) bf16
    tbr = params["tail_b"].reshape(C, 1)                            # (C, 1)

    kernel = functools.partial(_residual_group_kernel,
                               H=H, W=W, C=C, Cr=Cr, L=L)
    out = pl.pallas_call(
        kernel,
        out_shape=jax.ShapeDtypeStruct((N, C, HW), x_nchw.dtype),
        grid=(N,),
        in_specs=[
            pl.BlockSpec((1, C, HW), lambda n: (n, 0, 0)),       # x (lane-dense)
            pl.BlockSpec((L, C, 9 * C), lambda n: (0, 0, 0)),    # conv1 weights
            pl.BlockSpec((L, C, 1), lambda n: (0, 0, 0)),        # conv1 bias
            pl.BlockSpec((L, C, 9 * C), lambda n: (0, 0, 0)),    # conv2 weights
            pl.BlockSpec((L, C, 1), lambda n: (0, 0, 0)),        # conv2 bias
            pl.BlockSpec((L, C, Cr), lambda n: (0, 0, 0)),       # CA fc1 weight
            pl.BlockSpec((L, 1, Cr), lambda n: (0, 0, 0)),       # CA fc1 bias
            pl.BlockSpec((L, C, Cr), lambda n: (0, 0, 0)),       # CA fc2 weight (transposed)
            pl.BlockSpec((L, C, 1), lambda n: (0, 0, 0)),        # CA fc2 bias
            pl.BlockSpec((C, 9 * C), lambda n: (0, 0)),          # tail conv weight
            pl.BlockSpec((C, 1), lambda n: (0, 0)),              # tail conv bias
        ],
        out_specs=pl.BlockSpec((1, C, HW), lambda n: (n, 0, 0)),
        compiler_params=pltpu.CompilerParams(
            dimension_semantics=("parallel",)),
    )(x_nchw.reshape(N, C, HW), w1c, b1s, w2c, b2s,
      cw1, cb1, cw2, cb2, twc, tbr)
    return out.reshape(N, C, H, W)


# ----------------------------------------------------------------------------
# Parameter init + pure-JAX reference (same bf16-in / f32-accum conv numerics).
# ----------------------------------------------------------------------------
def init_params(key, n_feat, reduction, n_resblocks, ksize=3):
    cr = n_feat // reduction
    scale = 0.05

    def nxt():
        nonlocal key
        key, sub = jax.random.split(key)
        return sub

    params = {"rcab": []}
    for _ in range(n_resblocks):
        params["rcab"].append({
            "w1": scale * jax.random.normal(nxt(), (ksize, ksize, n_feat, n_feat), jnp.float32),
            "b1": scale * jax.random.normal(nxt(), (n_feat,), jnp.float32),
            "w2": scale * jax.random.normal(nxt(), (ksize, ksize, n_feat, n_feat), jnp.float32),
            "b2": scale * jax.random.normal(nxt(), (n_feat,), jnp.float32),
            "ca_w1": scale * jax.random.normal(nxt(), (n_feat, cr), jnp.float32),
            "ca_b1": scale * jax.random.normal(nxt(), (cr,), jnp.float32),
            "ca_w2": scale * jax.random.normal(nxt(), (cr, n_feat), jnp.float32),
            "ca_b2": scale * jax.random.normal(nxt(), (n_feat,), jnp.float32),
        })
    params["tail_w"] = scale * jax.random.normal(nxt(), (ksize, ksize, n_feat, n_feat), jnp.float32)
    params["tail_b"] = scale * jax.random.normal(nxt(), (n_feat,), jnp.float32)
    return params


def _ref_conv3x3(x, w, b):
    # bf16 inputs, f32 accumulation: same numerics as the Pallas kernel's matmul.
    y = lax.conv_general_dilated(
        x.astype(jnp.bfloat16), w.astype(jnp.bfloat16),
        window_strides=(1, 1), padding="SAME",
        dimension_numbers=("NHWC", "HWIO", "NHWC"),
        preferred_element_type=jnp.float32)
    return y + b.reshape(1, 1, 1, -1)


def _ref_residual_group_nchw(x_nchw, params):
    x = jnp.transpose(x_nchw, (0, 2, 3, 1))      # NCHW -> NHWC
    res = x
    for blk in params["rcab"]:
        y = jnp.maximum(_ref_conv3x3(res, blk["w1"], blk["b1"]), 0.0)
        y = _ref_conv3x3(y, blk["w2"], blk["b2"])
        pooled = jnp.mean(y, axis=(1, 2))                                   # (N, C)
        h = jnp.maximum(
            jnp.dot(pooled, blk["ca_w1"], precision=lax.Precision.HIGHEST)
            + blk["ca_b1"], 0.0)
        s = jax.nn.sigmoid(
            jnp.dot(h, blk["ca_w2"], precision=lax.Precision.HIGHEST)
            + blk["ca_b2"])
        res = y * s[:, None, None, :] + res
    out = _ref_conv3x3(res, params["tail_w"], params["tail_b"]) + x
    return jnp.transpose(out, (0, 3, 1, 2))      # NHWC -> NCHW


if __name__ == "__main__":
    # Small shapes consistent with the module: batch=2, n_feat=16, 16x16 image,
    # reduction=4, n_resblocks=2, kernel_size=3.  Input is PyTorch NCHW.
    N, C, H, W = 2, 16, 16, 16
    reduction, n_resblocks = 4, 2

    key = jax.random.PRNGKey(0)
    kx, kp = jax.random.split(key)
    x_nchw = jax.random.normal(kx, (N, C, H, W), jnp.float32)
    params = init_params(kp, C, reduction, n_resblocks)

    forward = jax.jit(residual_group_forward)
    out_nchw = jax.block_until_ready(forward(x_nchw, params))

    # correctness check vs. pure-JAX reference (same bf16-in / f32-acc recipe)
    ref = _ref_residual_group_nchw(x_nchw, params)
    np.testing.assert_allclose(np.asarray(out_nchw), np.asarray(ref),
                               rtol=1e-3, atol=1e-3)
    assert out_nchw.shape == (N, C, H, W)
    print("KERNEL_OK")
</pallas_src>

<mosaic_0001>
module attributes {stable_mosaic.version = 11 : i64} {
  func.func @_residual_group_kernel(%arg0: i32, %arg1: memref<1x16x256xf32, #tpu.memory_space<vmem>>, %arg2: memref<2x16x144xbf16, #tpu.memory_space<vmem>>, %arg3: memref<2x16x1xf32, #tpu.memory_space<vmem>>, %arg4: memref<2x16x144xbf16, #tpu.memory_space<vmem>>, %arg5: memref<2x16x1xf32, #tpu.memory_space<vmem>>, %arg6: memref<2x16x4xf32, #tpu.memory_space<vmem>>, %arg7: memref<2x1x4xf32, #tpu.memory_space<vmem>>, %arg8: memref<2x16x4xf32, #tpu.memory_space<vmem>>, %arg9: memref<2x16x1xf32, #tpu.memory_space<vmem>>, %arg10: memref<16x144xbf16, #tpu.memory_space<vmem>>, %arg11: memref<16x1xf32, #tpu.memory_space<vmem>>, %arg12: memref<1x16x256xf32, #tpu.memory_space<vmem>>) attributes {dimension_semantics = [#tpu.dimension_semantics<parallel>], iteration_bounds = array<i64: 2>, scalar_prefetch = 0 : i64, scratch_operands = 0 : i64, tpu.core_type = #tpu.core_type<tc>, window_params = [{transform_indices = @transform_0, window_bounds = array<i64: 1, 16, 256>}, {pipeline_mode = #tpu.pipeline_mode<synchronous>, transform_indices = @transform_1, window_bounds = array<i64: 2, 16, 144>}, {pipeline_mode = #tpu.pipeline_mode<synchronous>, transform_indices = @transform_2, window_bounds = array<i64: 2, 16, 1>}, {pipeline_mode = #tpu.pipeline_mode<synchronous>, transform_indices = @transform_3, window_bounds = array<i64: 2, 16, 144>}, {pipeline_mode = #tpu.pipeline_mode<synchronous>, transform_indices = @transform_4, window_bounds = array<i64: 2, 16, 1>}, {pipeline_mode = #tpu.pipeline_mode<synchronous>, transform_indices = @transform_5, window_bounds = array<i64: 2, 16, 4>}, {pipeline_mode = #tpu.pipeline_mode<synchronous>, transform_indices = @transform_6, window_bounds = array<i64: 2, 1, 4>}, {pipeline_mode = #tpu.pipeline_mode<synchronous>, transform_indices = @transform_7, window_bounds = array<i64: 2, 16, 4>}, {pipeline_mode = #tpu.pipeline_mode<synchronous>, transform_indices = @transform_8, window_bounds = array<i64: 2, 16, 1>}, {pipeline_mode = #tpu.pipeline_mode<synchronous>, transform_indices = @transform_9, window_bounds = array<i64: 16, 144>}, {pipeline_mode = #tpu.pipeline_mode<synchronous>, transform_indices = @transform_10, window_bounds = array<i64: 16, 1>}, {transform_indices = @transform_11, window_bounds = array<i64: 1, 16, 256>}]} {
    %0 = tpu.iota {dimensions = array<i32: 1>} : vector<1x256xi32>
    %c16_i32 = arith.constant 16 : i32
    %c0_i32 = arith.constant 0 : i32
    %1 = arith.cmpi eq, %c16_i32, %c0_i32 : i32
    %c1_i32 = arith.constant 1 : i32
    %2 = arith.select %1, %c1_i32, %c16_i32 : i32
    %3 = vector.broadcast %2 : i32 to vector<1x256xi32>
    %4 = arith.remsi %0, %3 : vector<1x256xi32>
    %c0_i32_0 = arith.constant 0 : i32
    %5 = vector.broadcast %c0_i32_0 : i32 to vector<1x256xi32>
    %6 = arith.cmpi ne, %4, %5 : vector<1x256xi32>
    %c0_i32_1 = arith.constant 0 : i32
    %7 = vector.broadcast %c0_i32_1 : i32 to vector<1x256xi32>
    %8 = arith.cmpi slt, %4, %7 : vector<1x256xi32>
    %c0_i32_2 = arith.constant 0 : i32
    %9 = arith.cmpi slt, %2, %c0_i32_2 : i32
    %10 = vector.broadcast %9 : i1 to vector<1x256xi1>
    %11 = vector.broadcast %10 : vector<1x256xi1> to vector<1x256xi1>
    %12 = arith.xori %8, %11 : vector<1x256xi1>
    %13 = arith.andi %12, %6 : vector<1x256xi1>
    %14 = vector.broadcast %2 : i32 to vector<1x256xi32>
    %15 = arith.addi %4, %14 : vector<1x256xi32>
    %16 = arith.select %13, %15, %4 : vector<1x256xi1>, vector<1x256xi32>
    %c1_i32_3 = arith.constant 1 : i32
    %17 = vector.broadcast %c1_i32_3 : i32 to vector<1x256xi32>
    %18 = arith.cmpi sge, %16, %17 : vector<1x256xi32>
    %c15_i32 = arith.constant 15 : i32
    %19 = vector.broadcast %c15_i32 : i32 to vector<1x256xi32>
    %20 = arith.cmpi slt, %16, %19 : vector<1x256xi32>
    %cst = arith.constant 0.000000e+00 : bf16
    %21 = vector.broadcast %cst : bf16 to vector<16x17xbf16>
    %c0 = arith.constant 0 : index
    %c0_4 = arith.constant 0 : index
    %c0_5 = arith.constant 0 : index
    %22 = vector.load %arg1[%c0, %c0_4, %c0_5] : memref<1x16x256xf32, #tpu.memory_space<vmem>>, vector<1x16x256xf32>
    %23 = vector.shape_cast %22 : vector<1x16x256xf32> to vector<16x256xf32>
    %c0_6 = arith.constant 0 : index
    %c0_7 = arith.constant 0 : index
    %c0_8 = arith.constant 0 : index
    %24 = vector.load %arg2[%c0_6, %c0_7, %c0_8] : memref<2x16x144xbf16, #tpu.memory_space<vmem>>, vector<1x16x144xbf16>
    %25 = vector.shape_cast %24 : vector<1x16x144xbf16> to vector<16x144xbf16>
    %c0_9 = arith.constant 0 : index
    %c0_10 = arith.constant 0 : index
    %c0_11 = arith.constant 0 : index
    %26 = vector.load %arg3[%c0_9, %c0_10, %c0_11] : memref<2x16x1xf32, #tpu.memory_space<vmem>>, vector<1x16x1xf32>
    %27 = vector.shape_cast %26 : vector<1x16x1xf32> to vector<16x1xf32>
    %28 = arith.truncf %23 : vector<16x256xf32> to vector<16x256xbf16>
    %29 = tpu.concatenate %21, %28, %21 in 1 : vector<16x17xbf16>, vector<16x256xbf16>, vector<16x17xbf16> -> vector<16x290xbf16>
    %30 = vector.extract_strided_slice %29 {offsets = [0, 0], sizes = [16, 256], strides = [1, 1]} : vector<16x290xbf16> to vector<16x256xbf16>
    %c0_i32_12 = arith.constant 0 : i32
    %31 = arith.sitofp %c0_i32_12 : i32 to bf16
    %32 = vector.shape_cast %18 : vector<1x256xi1> to vector<1x256xi1>
    %33 = vector.broadcast %32 : vector<1x256xi1> to vector<16x256xi1>
    %34 = vector.broadcast %31 : bf16 to vector<16x256xbf16>
    %35 = arith.select %33, %30, %34 : vector<16x256xi1>, vector<16x256xbf16>
    %36 = vector.extract_strided_slice %29 {offsets = [0, 1], sizes = [16, 256], strides = [1, 1]} : vector<16x290xbf16> to vector<16x256xbf16>
    %37 = vector.extract_strided_slice %29 {offsets = [0, 2], sizes = [16, 256], strides = [1, 1]} : vector<16x290xbf16> to vector<16x256xbf16>
    %c0_i32_13 = arith.constant 0 : i32
    %38 = arith.sitofp %c0_i32_13 : i32 to bf16
    %39 = vector.shape_cast %20 : vector<1x256xi1> to vector<1x256xi1>
    %40 = vector.broadcast %39 : vector<1x256xi1> to vector<16x256xi1>
    %41 = vector.broadcast %38 : bf16 to vector<16x256xbf16>
    %42 = arith.select %40, %37, %41 : vector<16x256xi1>, vector<16x256xbf16>
    %43 = vector.extract_strided_slice %29 {offsets = [0, 16], sizes = [16, 256], strides = [1, 1]} : vector<16x290xbf16> to vector<16x256xbf16>
    %c0_i32_14 = arith.constant 0 : i32
    %44 = arith.sitofp %c0_i32_14 : i32 to bf16
    %45 = vector.shape_cast %18 : vector<1x256xi1> to vector<1x256xi1>
    %46 = vector.broadcast %45 : vector<1x256xi1> to vector<16x256xi1>
    %47 = vector.broadcast %44 : bf16 to vector<16x256xbf16>
    %48 = arith.select %46, %43, %47 : vector<16x256xi1>, vector<16x256xbf16>
    %49 = vector.extract_strided_slice %29 {offsets = [0, 17], sizes = [16, 256], strides = [1, 1]} : vector<16x290xbf16> to vector<16x256xbf16>
    %50 = vector.extract_strided_slice %29 {offsets = [0, 18], sizes = [16, 256], strides = [1, 1]} : vector<16x290xbf16> to vector<16x256xbf16>
    %c0_i32_15 = arith.constant 0 : i32
    %51 = arith.sitofp %c0_i32_15 : i32 to bf16
    %52 = vector.shape_cast %20 : vector<1x256xi1> to vector<1x256xi1>
    %53 = vector.broadcast %52 : vector<1x256xi1> to vector<16x256xi1>
    %54 = vector.broadcast %51 : bf16 to vector<16x256xbf16>
    %55 = arith.select %53, %50, %54 : vector<16x256xi1>, vector<16x256xbf16>
    %56 = vector.extract_strided_slice %29 {offsets = [0, 32], sizes = [16, 256], strides = [1, 1]} : vector<16x290xbf16> to vector<16x256xbf16>
    %c0_i32_16 = arith.constant 0 : i32
    %57 = arith.sitofp %c0_i32_16 : i32 to bf16
    %58 = vector.shape_cast %18 : vector<1x256xi1> to vector<1x256xi1>
    %59 = vector.broadcast %58 : vector<1x256xi1> to vector<16x256xi1>
    %60 = vector.broadcast %57 : bf16 to vector<16x256xbf16>
    %61 = arith.select %59, %56, %60 : vector<16x256xi1>, vector<16x256xbf16>
    %62 = vector.extract_strided_slice %29 {offsets = [0, 33], sizes = [16, 256], strides = [1, 1]} : vector<16x290xbf16> to vector<16x256xbf16>
    %63 = vector.extract_strided_slice %29 {offsets = [0, 34], sizes = [16, 256], strides = [1, 1]} : vector<16x290xbf16> to vector<16x256xbf16>
    %c0_i32_17 = arith.constant 0 : i32
    %64 = arith.sitofp %c0_i32_17 : i32 to bf16
    %65 = vector.shape_cast %20 : vector<1x256xi1> to vector<1x256xi1>
    %66 = vector.broadcast %65 : vector<1x256xi1> to vector<16x256xi1>
    %67 = vector.broadcast %64 : bf16 to vector<16x256xbf16>
    %68 = arith.select %66, %63, %67 : vector<16x256xi1>, vector<16x256xbf16>
    %69 = tpu.concatenate %35, %36, %42, %48, %49, %55, %61, %62, %68 in 0 : vector<16x256xbf16>, vector<16x256xbf16>, vector<16x256xbf16>, vector<16x256xbf16>, vector<16x256xbf16>, vector<16x256xbf16>, vector<16x256xbf16>, vector<16x256xbf16>, vector<16x256xbf16> -> vector<144x256xbf16>
    %cst_18 = arith.constant dense<0.000000e+00> : vector<16x256xf32>
    %70 = tpu.matmul %25, %69, %cst_18 {dimension_numbers = #tpu.dot_dimension_numbers<[1], [0], [0], [1], [0, 0, 1, 1], [], []>} : vector<16x144xbf16>, vector<144x256xbf16>, vector<16x256xf32> -> vector<16x256xf32>
    %71 = vector.broadcast %27 : vector<16x1xf32> to vector<16x256xf32>
    %72 = arith.addf %70, %71 : vector<16x256xf32>
    %cst_19 = arith.constant 0.000000e+00 : f32
    %73 = vector.broadcast %cst_19 : f32 to vector<16x256xf32>
    %74 = arith.maximumf %72, %73 : vector<16x256xf32>
    %c0_20 = arith.constant 0 : index
    %c0_21 = arith.constant 0 : index
    %c0_22 = arith.constant 0 : index
    %75 = vector.load %arg4[%c0_20, %c0_21, %c0_22] : memref<2x16x144xbf16, #tpu.memory_space<vmem>>, vector<1x16x144xbf16>
    %76 = vector.shape_cast %75 : vector<1x16x144xbf16> to vector<16x144xbf16>
    %c0_23 = arith.constant 0 : index
    %c0_24 = arith.constant 0 : index
    %c0_25 = arith.constant 0 : index
    %77 = vector.load %arg5[%c0_23, %c0_24, %c0_25] : memref<2x16x1xf32, #tpu.memory_space<vmem>>, vector<1x16x1xf32>
    %78 = vector.shape_cast %77 : vector<1x16x1xf32> to vector<16x1xf32>
    %79 = arith.truncf %74 : vector<16x256xf32> to vector<16x256xbf16>
    %80 = tpu.concatenate %21, %79, %21 in 1 : vector<16x17xbf16>, vector<16x256xbf16>, vector<16x17xbf16> -> vector<16x290xbf16>
    %81 = vector.extract_strided_slice %80 {offsets = [0, 0], sizes = [16, 256], strides = [1, 1]} : vector<16x290xbf16> to vector<16x256xbf16>
    %c0_i32_26 = arith.constant 0 : i32
    %82 = arith.sitofp %c0_i32_26 : i32 to bf16
    %83 = vector.shape_cast %18 : vector<1x256xi1> to vector<1x256xi1>
    %84 = vector.broadcast %83 : vector<1x256xi1> to vector<16x256xi1>
    %85 = vector.broadcast %82 : bf16 to vector<16x256xbf16>
    %86 = arith.select %84, %81, %85 : vector<16x256xi1>, vector<16x256xbf16>
    %87 = vector.extract_strided_slice %80 {offsets = [0, 1], sizes = [16, 256], strides = [1, 1]} : vector<16x290xbf16> to vector<16x256xbf16>
    %88 = vector.extract_strided_slice %80 {offsets = [0, 2], sizes = [16, 256], strides = [1, 1]} : vector<16x290xbf16> to vector<16x256xbf16>
    %c0_i32_27 = arith.constant 0 : i32
    %89 = arith.sitofp %c0_i32_27 : i32 to bf16
    %90 = vector.shape_cast %20 : vector<1x256xi1> to vector<1x256xi1>
    %91 = vector.broadcast %90 : vector<1x256xi1> to vector<16x256xi1>
    %92 = vector.broadcast %89 : bf16 to vector<16x256xbf16>
    %93 = arith.select %91, %88, %92 : vector<16x256xi1>, vector<16x256xbf16>
    %94 = vector.extract_strided_slice %80 {offsets = [0, 16], sizes = [16, 256], strides = [1, 1]} : vector<16x290xbf16> to vector<16x256xbf16>
    %c0_i32_28 = arith.constant 0 : i32
    %95 = arith.sitofp %c0_i32_28 : i32 to bf16
    %96 = vector.shape_cast %18 : vector<1x256xi1> to vector<1x256xi1>
    %97 = vector.broadcast %96 : vector<1x256xi1> to vector<16x256xi1>
    %98 = vector.broadcast %95 : bf16 to vector<16x256xbf16>
    %99 = arith.select %97, %94, %98 : vector<16x256xi1>, vector<16x256xbf16>
    %100 = vector.extract_strided_slice %80 {offsets = [0, 17], sizes = [16, 256], strides = [1, 1]} : vector<16x290xbf16> to vector<16x256xbf16>
    %101 = vector.extract_strided_slice %80 {offsets = [0, 18], sizes = [16, 256], strides = [1, 1]} : vector<16x290xbf16> to vector<16x256xbf16>
    %c0_i32_29 = arith.constant 0 : i32
    %102 = arith.sitofp %c0_i32_29 : i32 to bf16
    %103 = vector.shape_cast %20 : vector<1x256xi1> to vector<1x256xi1>
    %104 = vector.broadcast %103 : vector<1x256xi1> to vector<16x256xi1>
    %105 = vector.broadcast %102 : bf16 to vector<16x256xbf16>
    %106 = arith.select %104, %101, %105 : vector<16x256xi1>, vector<16x256xbf16>
    %107 = vector.extract_strided_slice %80 {offsets = [0, 32], sizes = [16, 256], strides = [1, 1]} : vector<16x290xbf16> to vector<16x256xbf16>
    %c0_i32_30 = arith.constant 0 : i32
    %108 = arith.sitofp %c0_i32_30 : i32 to bf16
    %109 = vector.shape_cast %18 : vector<1x256xi1> to vector<1x256xi1>
    %110 = vector.broadcast %109 : vector<1x256xi1> to vector<16x256xi1>
    %111 = vector.broadcast %108 : bf16 to vector<16x256xbf16>
    %112 = arith.select %110, %107, %111 : vector<16x256xi1>, vector<16x256xbf16>
    %113 = vector.extract_strided_slice %80 {offsets = [0, 33], sizes = [16, 256], strides = [1, 1]} : vector<16x290xbf16> to vector<16x256xbf16>
    %114 = vector.extract_strided_slice %80 {offsets = [0, 34], sizes = [16, 256], strides = [1, 1]} : vector<16x290xbf16> to vector<16x256xbf16>
    %c0_i32_31 = arith.constant 0 : i32
    %115 = arith.sitofp %c0_i32_31 : i32 to bf16
    %116 = vector.shape_cast %20 : vector<1x256xi1> to vector<1x256xi1>
    %117 = vector.broadcast %116 : vector<1x256xi1> to vector<16x256xi1>
    %118 = vector.broadcast %115 : bf16 to vector<16x256xbf16>
    %119 = arith.select %117, %114, %118 : vector<16x256xi1>, vector<16x256xbf16>
    %120 = tpu.concatenate %86, %87, %93, %99, %100, %106, %112, %113, %119 in 0 : vector<16x256xbf16>, vector<16x256xbf16>, vector<16x256xbf16>, vector<16x256xbf16>, vector<16x256xbf16>, vector<16x256xbf16>, vector<16x256xbf16>, vector<16x256xbf16>, vector<16x256xbf16> -> vector<144x256xbf16>
    %cst_32 = arith.constant dense<0.000000e+00> : vector<16x256xf32>
    %121 = tpu.matmul %76, %120, %cst_32 {dimension_numbers = #tpu.dot_dimension_numbers<[1], [0], [0], [1], [0, 0, 1, 1], [], []>} : vector<16x144xbf16>, vector<144x256xbf16>, vector<16x256xf32> -> vector<16x256xf32>
    %122 = vector.broadcast %78 : vector<16x1xf32> to vector<16x256xf32>
    %123 = arith.addf %121, %122 : vector<16x256xf32>
    %cst_33 = arith.constant dense<0.000000e+00> : vector<16xf32>
    %124 = vector.multi_reduction <add>, %123, %cst_33 [1] : vector<16x256xf32> to vector<16xf32>
    %125 = vector.shape_cast %124 : vector<16xf32> to vector<16x1xf32>
    %cst_34 = arith.constant 2.560000e+02 : f32
    %126 = vector.broadcast %cst_34 : f32 to vector<16x1xf32>
    %127 = arith.divf %125, %126 : vector<16x1xf32>
    %c0_35 = arith.constant 0 : index
    %c0_36 = arith.constant 0 : index
    %c0_37 = arith.constant 0 : index
    %128 = vector.load %arg6[%c0_35, %c0_36, %c0_37] : memref<2x16x4xf32, #tpu.memory_space<vmem>>, vector<1x16x4xf32>
    %129 = vector.shape_cast %128 : vector<1x16x4xf32> to vector<16x4xf32>
    %130 = vector.broadcast %127 : vector<16x1xf32> to vector<16x4xf32>
    %131 = arith.mulf %129, %130 : vector<16x4xf32>
    %cst_38 = arith.constant dense<0.000000e+00> : vector<4xf32>
    %132 = vector.multi_reduction <add>, %131, %cst_38 [0] : vector<16x4xf32> to vector<4xf32>
    %133 = vector.shape_cast %132 : vector<4xf32> to vector<1x4xf32>
    %c0_39 = arith.constant 0 : index
    %c0_40 = arith.constant 0 : index
    %c0_41 = arith.constant 0 : index
    %134 = vector.load %arg7[%c0_39, %c0_40, %c0_41] : memref<2x1x4xf32, #tpu.memory_space<vmem>>, vector<1x1x4xf32>
    %135 = vector.shape_cast %134 : vector<1x1x4xf32> to vector<1x4xf32>
    %136 = arith.addf %133, %135 : vector<1x4xf32>
    %cst_42 = arith.constant 0.000000e+00 : f32
    %137 = vector.broadcast %cst_42 : f32 to vector<1x4xf32>
    %138 = arith.maximumf %136, %137 : vector<1x4xf32>
    %c0_43 = arith.constant 0 : index
    %c0_44 = arith.constant 0 : index
    %c0_45 = arith.constant 0 : index
    %139 = vector.load %arg8[%c0_43, %c0_44, %c0_45] : memref<2x16x4xf32, #tpu.memory_space<vmem>>, vector<1x16x4xf32>
    %140 = vector.shape_cast %139 : vector<1x16x4xf32> to vector<16x4xf32>
    %141 = vector.broadcast %138 : vector<1x4xf32> to vector<16x4xf32>
    %142 = arith.mulf %140, %141 : vector<16x4xf32>
    %cst_46 = arith.constant dense<0.000000e+00> : vector<16xf32>
    %143 = vector.multi_reduction <add>, %142, %cst_46 [1] : vector<16x4xf32> to vector<16xf32>
    %144 = vector.shape_cast %143 : vector<16xf32> to vector<16x1xf32>
    %c0_47 = arith.constant 0 : index
    %c0_48 = arith.constant 0 : index
    %c0_49 = arith.constant 0 : index
    %145 = vector.load %arg9[%c0_47, %c0_48, %c0_49] : memref<2x16x1xf32, #tpu.memory_space<vmem>>, vector<1x16x1xf32>
    %146 = vector.shape_cast %145 : vector<1x16x1xf32> to vector<16x1xf32>
    %147 = arith.addf %144, %146 : vector<16x1xf32>
    %148 = arith.negf %147 : vector<16x1xf32>
    %149 = math.exp %148 : vector<16x1xf32>
    %cst_50 = arith.constant 1.000000e+00 : f32
    %150 = vector.broadcast %cst_50 : f32 to vector<16x1xf32>
    %151 = arith.addf %150, %149 : vector<16x1xf32>
    %152 = arith.divf %150, %151 : vector<16x1xf32>
    %153 = vector.broadcast %152 : vector<16x1xf32> to vector<16x256xf32>
    %154 = arith.mulf %123, %153 : vector<16x256xf32>
    %155 = arith.addf %154, %23 : vector<16x256xf32>
    %c1 = arith.constant 1 : index
    %c0_51 = arith.constant 0 : index
    %c0_52 = arith.constant 0 : index
    %156 = vector.load %arg2[%c1, %c0_51, %c0_52] : memref<2x16x144xbf16, #tpu.memory_space<vmem>>, vector<1x16x144xbf16>
    %157 = vector.shape_cast %156 : vector<1x16x144xbf16> to vector<16x144xbf16>
    %c1_53 = arith.constant 1 : index
    %c0_54 = arith.constant 0 : index
    %c0_55 = arith.constant 0 : index
    %158 = vector.load %arg3[%c1_53, %c0_54, %c0_55] : memref<2x16x1xf32, #tpu.memory_space<vmem>>, vector<1x16x1xf32>
    %159 = vector.shape_cast %158 : vector<1x16x1xf32> to vector<16x1xf32>
    %160 = arith.truncf %155 : vector<16x256xf32> to vector<16x256xbf16>
    %161 = tpu.concatenate %21, %160, %21 in 1 : vector<16x17xbf16>, vector<16x256xbf16>, vector<16x17xbf16> -> vector<16x290xbf16>
    %162 = vector.extract_strided_slice %161 {offsets = [0, 0], sizes = [16, 256], strides = [1, 1]} : vector<16x290xbf16> to vector<16x256xbf16>
    %c0_i32_56 = arith.constant 0 : i32
    %163 = arith.sitofp %c0_i32_56 : i32 to bf16
    %164 = vector.shape_cast %18 : vector<1x256xi1> to vector<1x256xi1>
    %165 = vector.broadcast %164 : vector<1x256xi1> to vector<16x256xi1>
    %166 = vector.broadcast %163 : bf16 to vector<16x256xbf16>
    %167 = arith.select %165, %162, %166 : vector<16x256xi1>, vector<16x256xbf16>
    %168 = vector.extract_strided_slice %161 {offsets = [0, 1], sizes = [16, 256], strides = [1, 1]} : vector<16x290xbf16> to vector<16x256xbf16>
    %169 = vector.extract_strided_slice %161 {offsets = [0, 2], sizes = [16, 256], strides = [1, 1]} : vector<16x290xbf16> to vector<16x256xbf16>
    %c0_i32_57 = arith.constant 0 : i32
    %170 = arith.sitofp %c0_i32_57 : i32 to bf16
    %171 = vector.shape_cast %20 : vector<1x256xi1> to vector<1x256xi1>
    %172 = vector.broadcast %171 : vector<1x256xi1> to vector<16x256xi1>
    %173 = vector.broadcast %170 : bf16 to vector<16x256xbf16>
    %174 = arith.select %172, %169, %173 : vector<16x256xi1>, vector<16x256xbf16>
    %175 = vector.extract_strided_slice %161 {offsets = [0, 16], sizes = [16, 256], strides = [1, 1]} : vector<16x290xbf16> to vector<16x256xbf16>
    %c0_i32_58 = arith.constant 0 : i32
    %176 = arith.sitofp %c0_i32_58 : i32 to bf16
    %177 = vector.shape_cast %18 : vector<1x256xi1> to vector<1x256xi1>
    %178 = vector.broadcast %177 : vector<1x256xi1> to vector<16x256xi1>
    %179 = vector.broadcast %176 : bf16 to vector<16x256xbf16>
    %180 = arith.select %178, %175, %179 : vector<16x256xi1>, vector<16x256xbf16>
    %181 = vector.extract_strided_slice %161 {offsets = [0, 17], sizes = [16, 256], strides = [1, 1]} : vector<16x290xbf16> to vector<16x256xbf16>
    %182 = vector.extract_strided_slice %161 {offsets = [0, 18], sizes = [16, 256], strides = [1, 1]} : vector<16x290xbf16> to vector<16x256xbf16>
    %c0_i32_59 = arith.constant 0 : i32
    %183 = arith.sitofp %c0_i32_59 : i32 to bf16
    %184 = vector.shape_cast %20 : vector<1x256xi1> to vector<1x256xi1>
    %185 = vector.broadcast %184 : vector<1x256xi1> to vector<16x256xi1>
    %186 = vector.broadcast %183 : bf16 to vector<16x256xbf16>
    %187 = arith.select %185, %182, %186 : vector<16x256xi1>, vector<16x256xbf16>
    %188 = vector.extract_strided_slice %161 {offsets = [0, 32], sizes = [16, 256], strides = [1, 1]} : vector<16x290xbf16> to vector<16x256xbf16>
    %c0_i32_60 = arith.constant 0 : i32
    %189 = arith.sitofp %c0_i32_60 : i32 to bf16
    %190 = vector.shape_cast %18 : vector<1x256xi1> to vector<1x256xi1>
    %191 = vector.broadcast %190 : vector<1x256xi1> to vector<16x256xi1>
    %192 = vector.broadcast %189 : bf16 to vector<16x256xbf16>
    %193 = arith.select %191, %188, %192 : vector<16x256xi1>, vector<16x256xbf16>
    %194 = vector.extract_strided_slice %161 {offsets = [0, 33], sizes = [16, 256], strides = [1, 1]} : vector<16x290xbf16> to vector<16x256xbf16>
    %195 = vector.extract_strided_slice %161 {offsets = [0, 34], sizes = [16, 256], strides = [1, 1]} : vector<16x290xbf16> to vector<16x256xbf16>
    %c0_i32_61 = arith.constant 0 : i32
    %196 = arith.sitofp %c0_i32_61 : i32 to bf16
    %197 = vector.shape_cast %20 : vector<1x256xi1> to vector<1x256xi1>
    %198 = vector.broadcast %197 : vector<1x256xi1> to vector<16x256xi1>
    %199 = vector.broadcast %196 : bf16 to vector<16x256xbf16>
    %200 = arith.select %198, %195, %199 : vector<16x256xi1>, vector<16x256xbf16>
    %201 = tpu.concatenate %167, %168, %174, %180, %181, %187, %193, %194, %200 in 0 : vector<16x256xbf16>, vector<16x256xbf16>, vector<16x256xbf16>, vector<16x256xbf16>, vector<16x256xbf16>, vector<16x256xbf16>, vector<16x256xbf16>, vector<16x256xbf16>, vector<16x256xbf16> -> vector<144x256xbf16>
    %cst_62 = arith.constant dense<0.000000e+00> : vector<16x256xf32>
    %202 = tpu.matmul %157, %201, %cst_62 {dimension_numbers = #tpu.dot_dimension_numbers<[1], [0], [0], [1], [0, 0, 1, 1], [], []>} : vector<16x144xbf16>, vector<144x256xbf16>, vector<16x256xf32> -> vector<16x256xf32>
    %203 = vector.broadcast %159 : vector<16x1xf32> to vector<16x256xf32>
    %204 = arith.addf %202, %203 : vector<16x256xf32>
    %cst_63 = arith.constant 0.000000e+00 : f32
    %205 = vector.broadcast %cst_63 : f32 to vector<16x256xf32>
    %206 = arith.maximumf %204, %205 : vector<16x256xf32>
    %c1_64 = arith.constant 1 : index
    %c0_65 = arith.constant 0 : index
    %c0_66 = arith.constant 0 : index
    %207 = vector.load %arg4[%c1_64, %c0_65, %c0_66] : memref<2x16x144xbf16, #tpu.memory_space<vmem>>, vector<1x16x144xbf16>
    %208 = vector.shape_cast %207 : vector<1x16x144xbf16> to vector<16x144xbf16>
    %c1_67 = arith.constant 1 : index
    %c0_68 = arith.constant 0 : index
    %c0_69 = arith.constant 0 : index
    %209 = vector.load %arg5[%c1_67, %c0_68, %c0_69] : memref<2x16x1xf32, #tpu.memory_space<vmem>>, vector<1x16x1xf32>
    %210 = vector.shape_cast %209 : vector<1x16x1xf32> to vector<16x1xf32>
    %211 = arith.truncf %206 : vector<16x256xf32> to vector<16x256xbf16>
    %212 = tpu.concatenate %21, %211, %21 in 1 : vector<16x17xbf16>, vector<16x256xbf16>, vector<16x17xbf16> -> vector<16x290xbf16>
    %213 = vector.extract_strided_slice %212 {offsets = [0, 0], sizes = [16, 256], strides = [1, 1]} : vector<16x290xbf16> to vector<16x256xbf16>
    %c0_i32_70 = arith.constant 0 : i32
    %214 = arith.sitofp %c0_i32_70 : i32 to bf16
    %215 = vector.shape_cast %18 : vector<1x256xi1> to vector<1x256xi1>
    %216 = vector.broadcast %215 : vector<1x256xi1> to vector<16x256xi1>
    %217 = vector.broadcast %214 : bf16 to vector<16x256xbf16>
    %218 = arith.select %216, %213, %217 : vector<16x256xi1>, vector<16x256xbf16>
    %219 = vector.extract_strided_slice %212 {offsets = [0, 1], sizes = [16, 256], strides = [1, 1]} : vector<16x290xbf16> to vector<16x256xbf16>
    %220 = vector.extract_strided_slice %212 {offsets = [0, 2], sizes = [16, 256], strides = [1, 1]} : vector<16x290xbf16> to vector<16x256xbf16>
    %c0_i32_71 = arith.constant 0 : i32
    %221 = arith.sitofp %c0_i32_71 : i32 to bf16
    %222 = vector.shape_cast %20 : vector<1x256xi1> to vector<1x256xi1>
    %223 = vector.broadcast %222 : vector<1x256xi1> to vector<16x256xi1>
    %224 = vector.broadcast %221 : bf16 to vector<16x256xbf16>
    %225 = arith.select %223, %220, %224 : vector<16x256xi1>, vector<16x256xbf16>
    %226 = vector.extract_strided_slice %212 {offsets = [0, 16], sizes = [16, 256], strides = [1, 1]} : vector<16x290xbf16> to vector<16x256xbf16>
    %c0_i32_72 = arith.constant 0 : i32
    %227 = arith.sitofp %c0_i32_72 : i32 to bf16
    %228 = vector.shape_cast %18 : vector<1x256xi1> to vector<1x256xi1>
    %229 = vector.broadcast %228 : vector<1x256xi1> to vector<16x256xi1>
    %230 = vector.broadcast %227 : bf16 to vector<16x256xbf16>
    %231 = arith.select %229, %226, %230 : vector<16x256xi1>, vector<16x256xbf16>
    %232 = vector.extract_strided_slice %212 {offsets = [0, 17], sizes = [16, 256], strides = [1, 1]} : vector<16x290xbf16> to vector<16x256xbf16>
    %233 = vector.extract_strided_slice %212 {offsets = [0, 18], sizes = [16, 256], strides = [1, 1]} : vector<16x290xbf16> to vector<16x256xbf16>
    %c0_i32_73 = arith.constant 0 : i32
    %234 = arith.sitofp %c0_i32_73 : i32 to bf16
    %235 = vector.shape_cast %20 : vector<1x256xi1> to vector<1x256xi1>
    %236 = vector.broadcast %235 : vector<1x256xi1> to vector<16x256xi1>
    %237 = vector.broadcast %234 : bf16 to vector<16x256xbf16>
    %238 = arith.select %236, %233, %237 : vector<16x256xi1>, vector<16x256xbf16>
    %239 = vector.extract_strided_slice %212 {offsets = [0, 32], sizes = [16, 256], strides = [1, 1]} : vector<16x290xbf16> to vector<16x256xbf16>
    %c0_i32_74 = arith.constant 0 : i32
    %240 = arith.sitofp %c0_i32_74 : i32 to bf16
    %241 = vector.shape_cast %18 : vector<1x256xi1> to vector<1x256xi1>
    %242 = vector.broadcast %241 : vector<1x256xi1> to vector<16x256xi1>
    %243 = vector.broadcast %240 : bf16 to vector<16x256xbf16>
    %244 = arith.select %242, %239, %243 : vector<16x256xi1>, vector<16x256xbf16>
    %245 = vector.extract_strided_slice %212 {offsets = [0, 33], sizes = [16, 256], strides = [1, 1]} : vector<16x290xbf16> to vector<16x256xbf16>
    %246 = vector.extract_strided_slice %212 {offsets = [0, 34], sizes = [16, 256], strides = [1, 1]} : vector<16x290xbf16> to vector<16x256xbf16>
    %c0_i32_75 = arith.constant 0 : i32
    %247 = arith.sitofp %c0_i32_75 : i32 to bf16
    %248 = vector.shape_cast %20 : vector<1x256xi1> to vector<1x256xi1>
    %249 = vector.broadcast %248 : vector<1x256xi1> to vector<16x256xi1>
    %250 = vector.broadcast %247 : bf16 to vector<16x256xbf16>
    %251 = arith.select %249, %246, %250 : vector<16x256xi1>, vector<16x256xbf16>
    %252 = tpu.concatenate %218, %219, %225, %231, %232, %238, %244, %245, %251 in 0 : vector<16x256xbf16>, vector<16x256xbf16>, vector<16x256xbf16>, vector<16x256xbf16>, vector<16x256xbf16>, vector<16x256xbf16>, vector<16x256xbf16>, vector<16x256xbf16>, vector<16x256xbf16> -> vector<144x256xbf16>
    %cst_76 = arith.constant dense<0.000000e+00> : vector<16x256xf32>
    %253 = tpu.matmul %208, %252, %cst_76 {dimension_numbers = #tpu.dot_dimension_numbers<[1], [0], [0], [1], [0, 0, 1, 1], [], []>} : vector<16x144xbf16>, vector<144x256xbf16>, vector<16x256xf32> -> vector<16x256xf32>
    %254 = vector.broadcast %210 : vector<16x1xf32> to vector<16x256xf32>
    %255 = arith.addf %253, %254 : vector<16x256xf32>
    %cst_77 = arith.constant dense<0.000000e+00> : vector<16xf32>
    %256 = vector.multi_reduction <add>, %255, %cst_77 [1] : vector<16x256xf32> to vector<16xf32>
    %257 = vector.shape_cast %256 : vector<16xf32> to vector<16x1xf32>
    %cst_78 = arith.constant 2.560000e+02 : f32
    %258 = vector.broadcast %cst_78 : f32 to vector<16x1xf32>
    %259 = arith.divf %257, %258 : vector<16x1xf32>
    %c1_79 = arith.constant 1 : index
    %c0_80 = arith.constant 0 : index
    %c0_81 = arith.constant 0 : index
    %260 = vector.load %arg6[%c1_79, %c0_80, %c0_81] : memref<2x16x4xf32, #tpu.memory_space<vmem>>, vector<1x16x4xf32>
    %261 = vector.shape_cast %260 : vector<1x16x4xf32> to vector<16x4xf32>
    %262 = vector.broadcast %259 : vector<16x1xf32> to vector<16x4xf32>
    %263 = arith.mulf %261, %262 : vector<16x4xf32>
    %cst_82 = arith.constant dense<0.000000e+00> : vector<4xf32>
    %264 = vector.multi_reduction <add>, %263, %cst_82 [0] : vector<16x4xf32> to vector<4xf32>
    %265 = vector.shape_cast %264 : vector<4xf32> to vector<1x4xf32>
    %c1_83 = arith.constant 1 : index
    %c0_84 = arith.constant 0 : index
    %c0_85 = arith.constant 0 : index
    %266 = vector.load %arg7[%c1_83, %c0_84, %c0_85] : memref<2x1x4xf32, #tpu.memory_space<vmem>>, vector<1x1x4xf32>
    %267 = vector.shape_cast %266 : vector<1x1x4xf32> to vector<1x4xf32>
    %268 = arith.addf %265, %267 : vector<1x4xf32>
    %cst_86 = arith.constant 0.000000e+00 : f32
    %269 = vector.broadcast %cst_86 : f32 to vector<1x4xf32>
    %270 = arith.maximumf %268, %269 : vector<1x4xf32>
    %c1_87 = arith.constant 1 : index
    %c0_88 = arith.constant 0 : index
    %c0_89 = arith.constant 0 : index
    %271 = vector.load %arg8[%c1_87, %c0_88, %c0_89] : memref<2x16x4xf32, #tpu.memory_space<vmem>>, vector<1x16x4xf32>
    %272 = vector.shape_cast %271 : vector<1x16x4xf32> to vector<16x4xf32>
    %273 = vector.broadcast %270 : vector<1x4xf32> to vector<16x4xf32>
    %274 = arith.mulf %272, %273 : vector<16x4xf32>
    %cst_90 = arith.constant dense<0.000000e+00> : vector<16xf32>
    %275 = vector.multi_reduction <add>, %274, %cst_90 [1] : vector<16x4xf32> to vector<16xf32>
    %276 = vector.shape_cast %275 : vector<16xf32> to vector<16x1xf32>
    %c1_91 = arith.constant 1 : index
    %c0_92 = arith.constant 0 : index
    %c0_93 = arith.constant 0 : index
    %277 = vector.load %arg9[%c1_91, %c0_92, %c0_93] : memref<2x16x1xf32, #tpu.memory_space<vmem>>, vector<1x16x1xf32>
    %278 = vector.shape_cast %277 : vector<1x16x1xf32> to vector<16x1xf32>
    %279 = arith.addf %276, %278 : vector<16x1xf32>
    %280 = arith.negf %279 : vector<16x1xf32>
    %281 = math.exp %280 : vector<16x1xf32>
    %cst_94 = arith.constant 1.000000e+00 : f32
    %282 = vector.broadcast %cst_94 : f32 to vector<16x1xf32>
    %283 = arith.addf %282, %281 : vector<16x1xf32>
    %284 = arith.divf %282, %283 : vector<16x1xf32>
    %285 = vector.broadcast %284 : vector<16x1xf32> to vector<16x256xf32>
    %286 = arith.mulf %255, %285 : vector<16x256xf32>
    %287 = arith.addf %286, %155 : vector<16x256xf32>
    %c0_95 = arith.constant 0 : index
    %c0_96 = arith.constant 0 : index
    %288 = vector.load %arg10[%c0_95, %c0_96] : memref<16x144xbf16, #tpu.memory_space<vmem>>, vector<16x144xbf16>
    %c0_97 = arith.constant 0 : index
    %c0_98 = arith.constant 0 : index
    %289 = vector.load %arg11[%c0_97, %c0_98] : memref<16x1xf32, #tpu.memory_space<vmem>>, vector<16x1xf32>
    %290 = arith.truncf %287 : vector<16x256xf32> to vector<16x256xbf16>
    %291 = tpu.concatenate %21, %290, %21 in 1 : vector<16x17xbf16>, vector<16x256xbf16>, vector<16x17xbf16> -> vector<16x290xbf16>
    %292 = vector.extract_strided_slice %291 {offsets = [0, 0], sizes = [16, 256], strides = [1, 1]} : vector<16x290xbf16> to vector<16x256xbf16>
    %c0_i32_99 = arith.constant 0 : i32
    %293 = arith.sitofp %c0_i32_99 : i32 to bf16
    %294 = vector.shape_cast %18 : vector<1x256xi1> to vector<1x256xi1>
    %295 = vector.broadcast %294 : vector<1x256xi1> to vector<16x256xi1>
    %296 = vector.broadcast %293 : bf16 to vector<16x256xbf16>
    %297 = arith.select %295, %292, %296 : vector<16x256xi1>, vector<16x256xbf16>
    %298 = vector.extract_strided_slice %291 {offsets = [0, 1], sizes = [16, 256], strides = [1, 1]} : vector<16x290xbf16> to vector<16x256xbf16>
    %299 = vector.extract_strided_slice %291 {offsets = [0, 2], sizes = [16, 256], strides = [1, 1]} : vector<16x290xbf16> to vector<16x256xbf16>
    %c0_i32_100 = arith.constant 0 : i32
    %300 = arith.sitofp %c0_i32_100 : i32 to bf16
    %301 = vector.shape_cast %20 : vector<1x256xi1> to vector<1x256xi1>
    %302 = vector.broadcast %301 : vector<1x256xi1> to vector<16x256xi1>
    %303 = vector.broadcast %300 : bf16 to vector<16x256xbf16>
    %304 = arith.select %302, %299, %303 : vector<16x256xi1>, vector<16x256xbf16>
    %305 = vector.extract_strided_slice %291 {offsets = [0, 16], sizes = [16, 256], strides = [1, 1]} : vector<16x290xbf16> to vector<16x256xbf16>
    %c0_i32_101 = arith.constant 0 : i32
    %306 = arith.sitofp %c0_i32_101 : i32 to bf16
    %307 = vector.shape_cast %18 : vector<1x256xi1> to vector<1x256xi1>
    %308 = vector.broadcast %307 : vector<1x256xi1> to vector<16x256xi1>
    %309 = vector.broadcast %306 : bf16 to vector<16x256xbf16>
    %310 = arith.select %308, %305, %309 : vector<16x256xi1>, vector<16x256xbf16>
    %311 = vector.extract_strided_slice %291 {offsets = [0, 17], sizes = [16, 256], strides = [1, 1]} : vector<16x290xbf16> to vector<16x256xbf16>
    %312 = vector.extract_strided_slice %291 {offsets = [0, 18], sizes = [16, 256], strides = [1, 1]} : vector<16x290xbf16> to vector<16x256xbf16>
    %c0_i32_102 = arith.constant 0 : i32
    %313 = arith.sitofp %c0_i32_102 : i32 to bf16
    %314 = vector.shape_cast %20 : vector<1x256xi1> to vector<1x256xi1>
    %315 = vector.broadcast %314 : vector<1x256xi1> to vector<16x256xi1>
    %316 = vector.broadcast %313 : bf16 to vector<16x256xbf16>
    %317 = arith.select %315, %312, %316 : vector<16x256xi1>, vector<16x256xbf16>
    %318 = vector.extract_strided_slice %291 {offsets = [0, 32], sizes = [16, 256], strides = [1, 1]} : vector<16x290xbf16> to vector<16x256xbf16>
    %c0_i32_103 = arith.constant 0 : i32
    %319 = arith.sitofp %c0_i32_103 : i32 to bf16
    %320 = vector.shape_cast %18 : vector<1x256xi1> to vector<1x256xi1>
    %321 = vector.broadcast %320 : vector<1x256xi1> to vector<16x256xi1>
    %322 = vector.broadcast %319 : bf16 to vector<16x256xbf16>
    %323 = arith.select %321, %318, %322 : vector<16x256xi1>, vector<16x256xbf16>
    %324 = vector.extract_strided_slice %291 {offsets = [0, 33], sizes = [16, 256], strides = [1, 1]} : vector<16x290xbf16> to vector<16x256xbf16>
    %325 = vector.extract_strided_slice %291 {offsets = [0, 34], sizes = [16, 256], strides = [1, 1]} : vector<16x290xbf16> to vector<16x256xbf16>
    %c0_i32_104 = arith.constant 0 : i32
    %326 = arith.sitofp %c0_i32_104 : i32 to bf16
    %327 = vector.shape_cast %20 : vector<1x256xi1> to vector<1x256xi1>
    %328 = vector.broadcast %327 : vector<1x256xi1> to vector<16x256xi1>
    %329 = vector.broadcast %326 : bf16 to vector<16x256xbf16>
    %330 = arith.select %328, %325, %329 : vector<16x256xi1>, vector<16x256xbf16>
    %331 = tpu.concatenate %297, %298, %304, %310, %311, %317, %323, %324, %330 in 0 : vector<16x256xbf16>, vector<16x256xbf16>, vector<16x256xbf16>, vector<16x256xbf16>, vector<16x256xbf16>, vector<16x256xbf16>, vector<16x256xbf16>, vector<16x256xbf16>, vector<16x256xbf16> -> vector<144x256xbf16>
    %cst_105 = arith.constant dense<0.000000e+00> : vector<16x256xf32>
    %332 = tpu.matmul %288, %331, %cst_105 {dimension_numbers = #tpu.dot_dimension_numbers<[1], [0], [0], [1], [0, 0, 1, 1], [], []>} : vector<16x144xbf16>, vector<144x256xbf16>, vector<16x256xf32> -> vector<16x256xf32>
    %333 = vector.broadcast %289 : vector<16x1xf32> to vector<16x256xf32>
    %334 = arith.addf %332, %333 : vector<16x256xf32>
    %c0_106 = arith.constant 0 : index
    %c0_107 = arith.constant 0 : index
    %c0_108 = arith.constant 0 : index
    %335 = vector.load %arg1[%c0_106, %c0_107, %c0_108] : memref<1x16x256xf32, #tpu.memory_space<vmem>>, vector<1x16x256xf32>
    %336 = vector.shape_cast %335 : vector<1x16x256xf32> to vector<16x256xf32>
    %337 = arith.addf %334, %336 : vector<16x256xf32>
    %338 = vector.shape_cast %337 : vector<16x256xf32> to vector<1x16x256xf32>
    %c0_109 = arith.constant 0 : index
    %c0_110 = arith.constant 0 : index
    %c0_111 = arith.constant 0 : index
    %339 = vector.load %arg12[%c0_109, %c0_110, %c0_111] : memref<1x16x256xf32, #tpu.memory_space<vmem>>, vector<1x16x256xf32>
    tpu.vector_store %arg12[%c0_109, %c0_110, %c0_111], %338 {strides = array<i32>} : memref<1x16x256xf32, #tpu.memory_space<vmem>>, vector<1x16x256xf32>,
    return
  }
  func.func @transform_0(%arg0: i32) -> (i32, i32, i32) {
    %c0_i32 = arith.constant 0 : i32
    %c0_i32_0 = arith.constant 0 : i32
    %c0_i32_1 = arith.constant 0 : i32
    return %arg0, %c0_i32, %c0_i32_0 : i32, i32, i32
  }
  func.func @transform_1(%arg0: i32) -> (i32, i32, i32) {
    %c0_i32 = arith.constant 0 : i32
    %c0_i32_0 = arith.constant 0 : i32
    %c0_i32_1 = arith.constant 0 : i32
    %c0_i32_2 = arith.constant 0 : i32
    return %c0_i32, %c0_i32_0, %c0_i32_1 : i32, i32, i32
  }
  func.func @transform_2(%arg0: i32) -> (i32, i32, i32) {
    %c0_i32 = arith.constant 0 : i32
    %c0_i32_0 = arith.constant 0 : i32
    %c0_i32_1 = arith.constant 0 : i32
    %c0_i32_2 = arith.constant 0 : i32
    return %c0_i32, %c0_i32_0, %c0_i32_1 : i32, i32, i32
  }
  func.func @transform_3(%arg0: i32) -> (i32, i32, i32) {
    %c0_i32 = arith.constant 0 : i32
    %c0_i32_0 = arith.constant 0 : i32
    %c0_i32_1 = arith.constant 0 : i32
    %c0_i32_2 = arith.constant 0 : i32
    return %c0_i32, %c0_i32_0, %c0_i32_1 : i32, i32, i32
  }
  func.func @transform_4(%arg0: i32) -> (i32, i32, i32) {
    %c0_i32 = arith.constant 0 : i32
    %c0_i32_0 = arith.constant 0 : i32
    %c0_i32_1 = arith.constant 0 : i32
    %c0_i32_2 = arith.constant 0 : i32
    return %c0_i32, %c0_i32_0, %c0_i32_1 : i32, i32, i32
  }
  func.func @transform_5(%arg0: i32) -> (i32, i32, i32) {
    %c0_i32 = arith.constant 0 : i32
    %c0_i32_0 = arith.constant 0 : i32
    %c0_i32_1 = arith.constant 0 : i32
    %c0_i32_2 = arith.constant 0 : i32
    return %c0_i32, %c0_i32_0, %c0_i32_1 : i32, i32, i32
  }
  func.func @transform_6(%arg0: i32) -> (i32, i32, i32) {
    %c0_i32 = arith.constant 0 : i32
    %c0_i32_0 = arith.constant 0 : i32
    %c0_i32_1 = arith.constant 0 : i32
    %c0_i32_2 = arith.constant 0 : i32
    return %c0_i32, %c0_i32_0, %c0_i32_1 : i32, i32, i32
  }
  func.func @transform_7(%arg0: i32) -> (i32, i32, i32) {
    %c0_i32 = arith.constant 0 : i32
    %c0_i32_0 = arith.constant 0 : i32
    %c0_i32_1 = arith.constant 0 : i32
    %c0_i32_2 = arith.constant 0 : i32
    return %c0_i32, %c0_i32_0, %c0_i32_1 : i32, i32, i32
  }
  func.func @transform_8(%arg0: i32) -> (i32, i32, i32) {
    %c0_i32 = arith.constant 0 : i32
    %c0_i32_0 = arith.constant 0 : i32
    %c0_i32_1 = arith.constant 0 : i32
    %c0_i32_2 = arith.constant 0 : i32
    return %c0_i32, %c0_i32_0, %c0_i32_1 : i32, i32, i32
  }
  func.func @transform_9(%arg0: i32) -> (i32, i32) {
    %c0_i32 = arith.constant 0 : i32
    %c0_i32_0 = arith.constant 0 : i32
    %c0_i32_1 = arith.constant 0 : i32
    return %c0_i32, %c0_i32_0 : i32, i32
  }
  func.func @transform_10(%arg0: i32) -> (i32, i32) {
    %c0_i32 = arith.constant 0 : i32
    %c0_i32_0 = arith.constant 0 : i32
    %c0_i32_1 = arith.constant 0 : i32
    return %c0_i32, %c0_i32_0 : i32, i32
  }
  func.func @transform_11(%arg0: i32) -> (i32, i32, i32) {
    %c0_i32 = arith.constant 0 : i32
    %c0_i32_0 = arith.constant 0 : i32
    %c0_i32_1 = arith.constant 0 : i32
    return %arg0, %c0_i32, %c0_i32_0 : i32, i32, i32
  }
}

</mosaic_0001>

<llo_original>
// kernel: residual_group_forward.1
$region0: #{residual_group_forward.1}
  #allocation0 [shape = 'u32[]', space=smem, size = 0x4, offset = 0x4, fixed_abs, tag = 'smem constant byte address 0x4 - core index']
  #allocation1 [shape = 'u32[72,128]{1,0:T(1,128)}', space=vmem, size = 0x9000, scoped, tag = 'internal scratch']
  %s0 = inlined_call_operand.vmem [shape: f32[2,16,256], index: 0, kind: input, shape index: {}]
  %s1 = inlined_call_operand.vmem [shape: bf16[2,16,144], index: 1, kind: input, shape index: {}]
  %s2 = inlined_call_operand.vmem [shape: f32[2,16,1], index: 2, kind: input, shape index: {}]
  %s3 = inlined_call_operand.vmem [shape: bf16[2,16,144], index: 3, kind: input, shape index: {}]
  %s4 = inlined_call_operand.vmem [shape: f32[2,16,1], index: 4, kind: input, shape index: {}]
  %s5 = inlined_call_operand.vmem [shape: f32[2,16,4], index: 5, kind: input, shape index: {}]
  %s6 = inlined_call_operand.vmem [shape: f32[2,1,4], index: 6, kind: input, shape index: {}]
  %s7 = inlined_call_operand.vmem [shape: f32[2,16,4], index: 7, kind: input, shape index: {}]
  %s8 = inlined_call_operand.vmem [shape: f32[2,16,1], index: 8, kind: input, shape index: {}]
  %s9 = inlined_call_operand.vmem [shape: bf16[16,144], index: 9, kind: input, shape index: {}]
  %s10 = inlined_call_operand.vmem [shape: f32[16,1], index: 10, kind: input, shape index: {}]
  %s11 = inlined_call_operand.vmem [shape: f32[2,16,256], index: 11, kind: output, shape index: {}]
  %s12 = sld [smem:[#allocation0]]
  $region77: #{residual_group_forward.1} parent=0
    _
  %s14 = ssub.s32 1, %s12
  %s15 = scalar_select 0, %s14, %s12
  loop: start=0, step=1, limit=4
  $region2: #{residual_group_forward.1} parent=0 // loop_pre_header
    _
  $region3: #{residual_group_forward.1} parent=0 // loop_header
    %s17 = sphi 0, %s21
    %p18 = scmp.ge.s32.totalorder %s17, 4
    %s27 = sphi 0, %s29
    %s30 = sphi 0, %s27
    %s31 = sphi 0, %s30
    %s47 = sphi 0, %s31
    %s51 = sphi 0, %s51
    %s53 = sphi 0, %s51
    %s54 = sphi 0, %s53
    %s68 = sphi 0, %s54
    %s72 = sphi 0, %s72
    %s74 = sphi 0, %s72
    %s75 = sphi 0, %s74
    %s89 = sphi 0, %s75
    %s93 = sphi 0, %s93
    %s95 = sphi 0, %s93
    %s96 = sphi 0, %s95
    %s110 = sphi 0, %s96
    %s114 = sphi 0, %s114
    %s116 = sphi 0, %s114
    %s117 = sphi 0, %s116
    %s131 = sphi 0, %s117
    %s135 = sphi 0, %s135
    %s137 = sphi 0, %s135
    %s138 = sphi 0, %s137
    %s152 = sphi 0, %s138
    %s156 = sphi 0, %s156
    %s158 = sphi 0, %s156
    %s159 = sphi 0, %s158
    %s173 = sphi 0, %s159
    %s177 = sphi 0, %s177
    %s179 = sphi 0, %s177
    %s180 = sphi 0, %s179
    %s194 = sphi 0, %s180
    %s198 = sphi 0, %s198
    %s200 = sphi 0, %s198
    %s201 = sphi 0, %s200
    %s215 = sphi 0, %s201
    %s219 = sphi 0, %s219
    %s221 = sphi 0, %s219
    %s222 = sphi 0, %s221
    %s236 = sphi 0, %s222
    %s240 = sphi 0, %s240
    %s242 = sphi 0, %s240
    %s243 = sphi 0, %s242
    %s257 = sphi 0, %s243
    %s263 = sphi 0, %s265
    %s266 = sphi 0, %s263
    %s267 = sphi 0, %s266
    %s283 = sphi 0, %s267
  $region4: #{residual_group_forward.1} parent=0 // loop_header_branch
    %20 = sbr.rel (%p18) target = $region8
  $region5: #{residual_group_forward.1} parent=0 // loop_body
    %s22 = ssub.s32 %s17, 1
    %s23 = ssub.s32 %s17, 2
    %s24 = sadd.s32 %s17, 1
    %s25 = ssub.s32 %s17, %s24
    %p26 = scmp.eq.s32.totalorder %s25, 0
    %s28 = sadd.s32 %s27, 1
    %s29 = scalar_select %p26, %s27, %s28
    %p32 = pneg %p26
    %p33 = scmp.eq.s32.totalorder %s17, 1
    %p34 = por %p32, %p33
    %p35 = scmp.ne.s32.totalorder %s27, %s30
    %p36 = scmp.eq.s32.totalorder %s17, 0
    %p37 = por %p35, %p36
    %p38 = scmp.ne.s32.totalorder %s27, %s30
    %p39 = scmp.eq.s32.totalorder %s22, 1
    %p40 = por %p38, %p39
    %p41 = scmp.ne.s32.totalorder %s30, %s31
    %p42 = scmp.eq.s32.totalorder %s22, 0
    %p43 = por %p41, %p42
    %p44 = scmp.ne.s32.totalorder %s30, %s31
    %p45 = scmp.eq.s32.totalorder %s23, 1
    %p46 = por %p44, %p45
    %p48 = scmp.ne.s32.totalorder %s31, %s47
    %p49 = scmp.eq.s32.totalorder %s23, 0
    %p50 = por %p48, %p49
    %s52 = sadd.s32 %s51, 1
    %p55 = scmp.eq.s32.totalorder %s17, 1
    %p56 = scmp.ne.s32.totalorder %s51, %s53
    %p57 = scmp.eq.s32.totalorder %s17, 0
    %p58 = por %p56, %p57
    %p59 = scmp.ne.s32.totalorder %s51, %s53
    %p60 = scmp.eq.s32.totalorder %s22, 1
    %p61 = por %p59, %p60
    %p62 = scmp.ne.s32.totalorder %s53, %s54
    %p63 = scmp.eq.s32.totalorder %s22, 0
    %p64 = por %p62, %p63
    %p65 = scmp.ne.s32.totalorder %s53, %s54
    %p66 = scmp.eq.s32.totalorder %s23, 1
    %p67 = por %p65, %p66
    %p69 = scmp.ne.s32.totalorder %s54, %s68
    %p70 = scmp.eq.s32.totalorder %s23, 0
    %p71 = por %p69, %p70
    %s73 = sadd.s32 %s72, 1
    %p76 = scmp.eq.s32.totalorder %s17, 1
    %p77 = scmp.ne.s32.totalorder %s72, %s74
    %p78 = scmp.eq.s32.totalorder %s17, 0
    %p79 = por %p77, %p78
    %p80 = scmp.ne.s32.totalorder %s72, %s74
    %p81 = scmp.eq.s32.totalorder %s22, 1
    %p82 = por %p80, %p81
    %p83 = scmp.ne.s32.totalorder %s74, %s75
    %p84 = scmp.eq.s32.totalorder %s22, 0
    %p85 = por %p83, %p84
    %p86 = scmp.ne.s32.totalorder %s74, %s75
    %p87 = scmp.eq.s32.totalorder %s23, 1
    %p88 = por %p86, %p87
    %p90 = scmp.ne.s32.totalorder %s75, %s89
    %p91 = scmp.eq.s32.totalorder %s23, 0
    %p92 = por %p90, %p91
    %s94 = sadd.s32 %s93, 1
    %p97 = scmp.eq.s32.totalorder %s17, 1
    %p98 = scmp.ne.s32.totalorder %s93, %s95
    %p99 = scmp.eq.s32.totalorder %s17, 0
    %p100 = por %p98, %p99
    %p101 = scmp.ne.s32.totalorder %s93, %s95
    %p102 = scmp.eq.s32.totalorder %s22, 1
    %p103 = por %p101, %p102
    %p104 = scmp.ne.s32.totalorder %s95, %s96
    %p105 = scmp.eq.s32.totalorder %s22, 0
    %p106 = por %p104, %p105
    %p107 = scmp.ne.s32.totalorder %s95, %s96
    %p108 = scmp.eq.s32.totalorder %s23, 1
    %p109 = por %p107, %p108
    %p111 = scmp.ne.s32.totalorder %s96, %s110
    %p112 = scmp.eq.s32.totalorder %s23, 0
    %p113 = por %p111, %p112
    %s115 = sadd.s32 %s114, 1
    %p118 = scmp.eq.s32.totalorder %s17, 1
    %p119 = scmp.ne.s32.totalorder %s114, %s116
    %p120 = scmp.eq.s32.totalorder %s17, 0
    %p121 = por %p119, %p120
    %p122 = scmp.ne.s32.totalorder %s114, %s116
    %p123 = scmp.eq.s32.totalorder %s22, 1
    %p124 = por %p122, %p123
    %p125 = scmp.ne.s32.totalorder %s116, %s117
    %p126 = scmp.eq.s32.totalorder %s22, 0
    %p127 = por %p125, %p126
    %p128 = scmp.ne.s32.totalorder %s116, %s117
    %p129 = scmp.eq.s32.totalorder %s23, 1
    %p130 = por %p128, %p129
    %p132 = scmp.ne.s32.totalorder %s117, %s131
    %p133 = scmp.eq.s32.totalorder %s23, 0
    %p134 = por %p132, %p133
    %s136 = sadd.s32 %s135, 1
    %p139 = scmp.eq.s32.totalorder %s17, 1
    %p140 = scmp.ne.s32.totalorder %s135, %s137
    %p141 = scmp.eq.s32.totalorder %s17, 0
    %p142 = por %p140, %p141
    %p143 = scmp.ne.s32.totalorder %s135, %s137
    %p144 = scmp.eq.s32.totalorder %s22, 1
    %p145 = por %p143, %p144
    %p146 = scmp.ne.s32.totalorder %s137, %s138
    %p147 = scmp.eq.s32.totalorder %s22, 0
    %p148 = por %p146, %p147
    %p149 = scmp.ne.s32.totalorder %s137, %s138
    %p150 = scmp.eq.s32.totalorder %s23, 1
    %p151 = por %p149, %p150
    %p153 = scmp.ne.s32.totalorder %s138, %s152
    %p154 = scmp.eq.s32.totalorder %s23, 0
    %p155 = por %p153, %p154
    %s157 = sadd.s32 %s156, 1
    %p160 = scmp.eq.s32.totalorder %s17, 1
    %p161 = scmp.ne.s32.totalorder %s156, %s158
    %p162 = scmp.eq.s32.totalorder %s17, 0
    %p163 = por %p161, %p162
    %p164 = scmp.ne.s32.totalorder %s156, %s158
    %p165 = scmp.eq.s32.totalorder %s22, 1
    %p166 = por %p164, %p165
    %p167 = scmp.ne.s32.totalorder %s158, %s159
    %p168 = scmp.eq.s32.totalorder %s22, 0
    %p169 = por %p167, %p168
    %p170 = scmp.ne.s32.totalorder %s158, %s159
    %p171 = scmp.eq.s32.totalorder %s23, 1
    %p172 = por %p170, %p171
    %p174 = scmp.ne.s32.totalorder %s159, %s173
    %p175 = scmp.eq.s32.totalorder %s23, 0
    %p176 = por %p174, %p175
    %s178 = sadd.s32 %s177, 1
    %p181 = scmp.eq.s32.totalorder %s17, 1
    %p182 = scmp.ne.s32.totalorder %s177, %s179
    %p183 = scmp.eq.s32.totalorder %s17, 0
    %p184 = por %p182, %p183
    %p185 = scmp.ne.s32.totalorder %s177, %s179
    %p186 = scmp.eq.s32.totalorder %s22, 1
    %p187 = por %p185, %p186
    %p188 = scmp.ne.s32.totalorder %s179, %s180
    %p189 = scmp.eq.s32.totalorder %s22, 0
    %p190 = por %p188, %p189
    %p191 = scmp.ne.s32.totalorder %s179, %s180
    %p192 = scmp.eq.s32.totalorder %s23, 1
    %p193 = por %p191, %p192
    %p195 = scmp.ne.s32.totalorder %s180, %s194
    %p196 = scmp.eq.s32.totalorder %s23, 0
    %p197 = por %p195, %p196
    %s199 = sadd.s32 %s198, 1
    %p202 = scmp.eq.s32.totalorder %s17, 1
    %p203 = scmp.ne.s32.totalorder %s198, %s200
    %p204 = scmp.eq.s32.totalorder %s17, 0
    %p205 = por %p203, %p204
    %p206 = scmp.ne.s32.totalorder %s198, %s200
    %p207 = scmp.eq.s32.totalorder %s22, 1
    %p208 = por %p206, %p207
    %p209 = scmp.ne.s32.totalorder %s200, %s201
    %p210 = scmp.eq.s32.totalorder %s22, 0
    %p211 = por %p209, %p210
    %p212 = scmp.ne.s32.totalorder %s200, %s201
    %p213 = scmp.eq.s32.totalorder %s23, 1
    %p214 = por %p212, %p213
    %p216 = scmp.ne.s32.totalorder %s201, %s215
    %p217 = scmp.eq.s32.totalorder %s23, 0
    %p218 = por %p216, %p217
    %s220 = sadd.s32 %s219, 1
    %p223 = scmp.eq.s32.totalorder %s17, 1
    %p224 = scmp.ne.s32.totalorder %s219, %s221
    %p225 = scmp.eq.s32.totalorder %s17, 0
    %p226 = por %p224, %p225
    %p227 = scmp.ne.s32.totalorder %s219, %s221
    %p228 = scmp.eq.s32.totalorder %s22, 1
    %p229 = por %p227, %p228
    %p230 = scmp.ne.s32.totalorder %s221, %s222
    %p231 = scmp.eq.s32.totalorder %s22, 0
    %p232 = por %p230, %p231
    %p233 = scmp.ne.s32.totalorder %s221, %s222
    %p234 = scmp.eq.s32.totalorder %s23, 1
    %p235 = por %p233, %p234
    %p237 = scmp.ne.s32.totalorder %s222, %s236
    %p238 = scmp.eq.s32.totalorder %s23, 0
    %p239 = por %p237, %p238
    %s241 = sadd.s32 %s240, 1
    %p244 = scmp.eq.s32.totalorder %s17, 1
    %p245 = scmp.ne.s32.totalorder %s240, %s242
    %p246 = scmp.eq.s32.totalorder %s17, 0
    %p247 = por %p245, %p246
    %p248 = scmp.ne.s32.totalorder %s240, %s242
    %p249 = scmp.eq.s32.totalorder %s22, 1
    %p250 = por %p248, %p249
    %p251 = scmp.ne.s32.totalorder %s242, %s243
    %p252 = scmp.eq.s32.totalorder %s22, 0
    %p253 = por %p251, %p252
    %p254 = scmp.ne.s32.totalorder %s242, %s243
    %p255 = scmp.eq.s32.totalorder %s23, 1
    %p256 = por %p254, %p255
    %p258 = scmp.ne.s32.totalorder %s243, %s257
    %p259 = scmp.eq.s32.totalorder %s23, 0
    %p260 = por %p258, %p259
    %s261 = ssub.s32 %s17, %s24
    %p262 = scmp.eq.s32.totalorder %s261, 0
    %s264 = sadd.s32 %s263, 1
    %s265 = scalar_select %p262, %s263, %s264
    %p268 = pneg %p262
    %p269 = scmp.eq.s32.totalorder %s17, 1
    %p270 = por %p268, %p269
    %p271 = scmp.ne.s32.totalorder %s263, %s266
    %p272 = scmp.eq.s32.totalorder %s17, 0
    %p273 = por %p271, %p272
    %p274 = scmp.ne.s32.totalorder %s263, %s266
    %p275 = scmp.eq.s32.totalorder %s22, 1
    %p276 = por %p274, %p275
    %p277 = scmp.ne.s32.totalorder %s266, %s267
    %p278 = scmp.eq.s32.totalorder %s22, 0
    %p279 = por %p277, %p278
    %p280 = scmp.ne.s32.totalorder %s266, %s267
    %p281 = scmp.eq.s32.totalorder %s23, 1
    %p282 = por %p280, %p281
    %p284 = scmp.ne.s32.totalorder %s267, %s283
    %p285 = scmp.eq.s32.totalorder %s23, 0
    %p286 = por %p284, %p285
    %p287 = scmp.le.s32.totalorder 1, %s17
    %p288 = scmp.lt.s32.totalorder %s17, 3
    %p289 = pnand %p287, %p288
    %p290 = pneg %p289
    // Predicated region
    $region9: #{residual_group_forward.1} parent=5 // pred_check
      _
    $region10: #{residual_group_forward.1} parent=5 // pred_check_branch
      %292 = sbr.rel (%p289) target = $region12
    $region11: #{residual_group_forward.1} parent=5 // pred_region
      %s293 = ssub.s32 %s17, 1
      // Predicated region
      $region13: #{residual_group_forward.1} parent=11 // pred_check
        %p294 = pneg %p64
      $region14: #{residual_group_forward.1} parent=11 // pred_check_branch
        %296 = sbr.rel (%p294) target = $region16
      $region15: #{residual_group_forward.1} parent=11 // pred_region
        _
      $region16: #{residual_group_forward.1} parent=11 // pred_fallthru
        _
      // Predicated region
      $region17: #{residual_group_forward.1} parent=11 // pred_check
        %p297 = pneg %p85
      $region18: #{residual_group_forward.1} parent=11 // pred_check_branch
        %299 = sbr.rel (%p297) target = $region20
      $region19: #{residual_group_forward.1} parent=11 // pred_region
        _
      $region20: #{residual_group_forward.1} parent=11 // pred_fallthru
        _
      // Predicated region
      $region21: #{residual_group_forward.1} parent=11 // pred_check
        %p300 = pneg %p106
      $region22: #{residual_group_forward.1} parent=11 // pred_check_branch
        %302 = sbr.rel (%p300) target = $region24
      $region23: #{residual_group_forward.1} parent=11 // pred_region
        _
      $region24: #{residual_group_forward.1} parent=11 // pred_fallthru
        _
      // Predicated region
      $region25: #{residual_group_forward.1} parent=11 // pred_check
        %p303 = pneg %p127
      $region26: #{residual_group_forward.1} parent=11 // pred_check_branch
        %305 = sbr.rel (%p303) target = $region28
      $region27: #{residual_group_forward.1} parent=11 // pred_region
        _
      $region28: #{residual_group_forward.1} parent=11 // pred_fallthru
        _
      // Predicated region
      $region29: #{residual_group_forward.1} parent=11 // pred_check
        %p306 = pneg %p148
      $region30: #{residual_group_forward.1} parent=11 // pred_check_branch
        %308 = sbr.rel (%p306) target = $region32
      $region31: #{residual_group_forward.1} parent=11 // pred_region
        _
      $region32: #{residual_group_forward.1} parent=11 // pred_fallthru
        _
      // Predicated region
      $region33: #{residual_group_forward.1} parent=11 // pred_check
        %p309 = pneg %p169
      $region34: #{residual_group_forward.1} parent=11 // pred_check_branch
        %311 = sbr.rel (%p309) target = $region36
      $region35: #{residual_group_forward.1} parent=11 // pred_region
        _
      $region36: #{residual_group_forward.1} parent=11 // pred_fallthru
        _
      // Predicated region
      $region37: #{residual_group_forward.1} parent=11 // pred_check
        %p312 = pneg %p190
      $region38: #{residual_group_forward.1} parent=11 // pred_check_branch
        %314 = sbr.rel (%p312) target = $region40
      $region39: #{residual_group_forward.1} parent=11 // pred_region
        _
      $region40: #{residual_group_forward.1} parent=11 // pred_fallthru
        _
      // Predicated region
      $region41: #{residual_group_forward.1} parent=11 // pred_check
        %p315 = pneg %p211
      $region42: #{residual_group_forward.1} parent=11 // pred_check_branch
        %317 = sbr.rel (%p315) target = $region44
      $region43: #{residual_group_forward.1} parent=11 // pred_region
        _
      $region44: #{residual_group_forward.1} parent=11 // pred_fallthru
        _
      // Predicated region
      $region45: #{residual_group_forward.1} parent=11 // pred_check
        %p318 = pneg %p232
      $region46: #{residual_group_forward.1} parent=11 // pred_check_branch
        %320 = sbr.rel (%p318) target = $region48
      $region47: #{residual_group_forward.1} parent=11 // pred_region
        _
      $region48: #{residual_group_forward.1} parent=11 // pred_fallthru
        _
      // Predicated region
      $region49: #{residual_group_forward.1} parent=11 // pred_check
        %p321 = pneg %p253
      $region50: #{residual_group_forward.1} parent=11 // pred_check_branch
        %323 = sbr.rel (%p321) target = $region52
      $region51: #{residual_group_forward.1} parent=11 // pred_region
        _
      $region52: #{residual_group_forward.1} parent=11 // pred_fallthru
        _
    $region12: #{residual_group_forward.1} parent=5 // pred_fallthru
      _
    %p324 = scmp.lt.s32.totalorder %s17, 2
    // Predicated region
    $region53: #{residual_group_forward.1} parent=5 // pred_check
      %p325 = pneg %p324
    $region54: #{residual_group_forward.1} parent=5 // pred_check_branch
      %327 = sbr.rel (%p325) target = $region56
    $region55: #{residual_group_forward.1} parent=5 // pred_region
      // Predicated region
      $region57: #{residual_group_forward.1} parent=55 // pred_check
        %p328 = pneg %p37
      $region58: #{residual_group_forward.1} parent=55 // pred_check_branch
        %330 = sbr.rel (%p328) target = $region60
      $region59: #{residual_group_forward.1} parent=55 // pred_region
        %p331 = scmp.lt.s32.totalorder %s17, 1
        %s332 = scalar_select %p331, %s17, 1
        %s333 = smul.addr %s332, 4
        %s334 = smul.addr %s333, 8
        %s335 = scalar_lea.vmem %s0, %s334
      $region60: #{residual_group_forward.1} parent=55 // pred_fallthru
        _
    $region56: #{residual_group_forward.1} parent=5 // pred_fallthru
      _
    %p336 = scmp.le.s32.totalorder 1, %s17
    %p337 = scmp.lt.s32.totalorder %s17, 3
    %p338 = pnand %p336, %p337
    %p339 = pneg %p338
    // Predicated region
    $region61: #{residual_group_forward.1} parent=5 // pred_check
      _
    $region62: #{residual_group_forward.1} parent=5 // pred_check_branch
      %341 = sbr.rel (%p338) target = $region64
    $region63: #{residual_group_forward.1} parent=5 // pred_region
      %s342 = ssub.s32 %s17, 1
      %p343 = scmp.lt.s32.totalorder %s22, 1
      %s344 = scalar_select %p343, %s22, 1
      %s345 = smul.addr %s344, 4
      %s346 = smul.addr %s345, 8
      %s347 = scalar_lea.vmem %s0, %s346
      %p348 = pneg %p43
      %p349 = pneg %p40
      %p350 = pneg %p64
      %p351 = pneg %p61
      %p352 = pneg %p85
      %p353 = pneg %p82
      %p354 = pneg %p106
      %p355 = pneg %p103
      %p356 = pneg %p127
      %p357 = pneg %p124
      %p358 = pneg %p148
      %p359 = pneg %p145
      %p360 = pneg %p169
      %p361 = pneg %p166
      %p362 = pneg %p190
      %p363 = pneg %p187
      %p364 = pneg %p211
      %p365 = pneg %p208
      %p366 = pneg %p232
      %p367 = pneg %p229
      %p368 = pneg %p253
      %p369 = pneg %p250
      %p370 = pneg %p279
      %p371 = pneg %p276
      %p372 = scmp.lt.s32.totalorder %s22, 1
      %s373 = scalar_select %p372, %s22, 1
      %s374 = smul.addr %s373, 4
      %s375 = smul.addr %s374, 8
      %s376 = scalar_lea.vmem %s11, %s375
      %p377 = scmp.lt.s32.totalorder %s22, 1
      %s378 = scalar_select %p377, %s22, 1
      %s379 = smul.addr %s378, 4
      %s380 = smul.addr %s379, 8
      %s381 = scalar_lea.vmem %s0, %s380
      %p382 = scmp.lt.s32.totalorder %s22, 1
      %s383 = scalar_select %p382, %s22, 1
      %s384 = smul.addr %s383, 4
      %s385 = smul.addr %s384, 8
      %s386 = scalar_lea.vmem %s11, %s385
      %v390 = vlaneseq
      %v391 = vand.u32 %v390, 127
      %v392 = vadd.s32 %v391, 128
      %vm393 = vcmp.lt.s32.totalorder %v391, 0
      %v394 = vsub.s32 0, %v391
      %v395 = vsel %vm393, %v394, %v391
      %v396 = vshrl.u32 %v395, 4
      %v397 = vand.u32 %v395, 15
      %v398 = vsub.s32 0, %v397
      %v399 = vsel %vm393, %v398, %v397
      %vm400 = vcmp.lt.s32.totalorder %v392, 0
      %v401 = vsub.s32 0, %v392
      %v402 = vsel %vm400, %v401, %v392
      %v403 = vshrl.u32 %v402, 4
      %v404 = vand.u32 %v402, 15
      %v405 = vsub.s32 0, %v404
      %v406 = vsel %vm400, %v405, %v404
      %vm407 = vcmp.ne.s32.totalorder %v399, 0
      %vm408 = vcmp.ne.s32.totalorder %v406, 0
      %vm409 = vcmp.lt.s32.totalorder %v399, 0
      %vm410 = vcmp.lt.s32.totalorder %v406, 0
      %vm411 = vmand %vm409, %vm407
      %vm412 = vmand %vm410, %vm408
      %v413 = vadd.s32 %v399, 16
      %v414 = vadd.s32 %v406, 16
      %v415 = vsel %vm411, %v413, %v399
      %v416 = vsel %vm412, %v414, %v406
      %vm417 = vcmp.ge.s32.totalorder %v415, 1
      %vm418 = vcmp.ge.s32.totalorder %v416, 1
      %vm419 = vcmp.lt.s32.totalorder %v415, 15
      %vm420 = vcmp.lt.s32.totalorder %v416, 15
      %v421 = vld [vmem:[%s381] sm:$0xff]
      %v422 = vld [vmem:[%s381 + $0x8] sm:$0xff]
      %v423 = vld [vmem:[%s381 + $0x10] sm:$0xff]
      %v424 = vld [vmem:[%s381 + $0x18] sm:$0xff]
      %v425 = vld [vmem:[%s1] sm:$0xff]
      %v426 = vld [vmem:[%s1 + $0x8] sm:$0xff]
      %v427 = vld [vmem:[%s2] sm:$0xff]
      %v428 = vld [vmem:[%s2 + $0x8] sm:$0xff]
      %v429 = vpack.c.bf16 %v422, %v421
      %v430 = vpack.c.bf16 %v424, %v423
      %v433 = vunpack.c.l.b16 %v429
      %v434 = vunpack.c.h.b16 %v429
      %v435 = vunpack.c.l.b16 %v430
      %v436 = vunpack.c.h.b16 %v430
      %v437 = vpack.c.b16 %v435, %v433
      %v438 = vpack.c.b16 %v436, %v434
      %439 = vrot.lane.b32.xlu0 %v437, 17
      %v440 = vpop.permute.xlu0 %439
      %441 = vrot.lane.b32.xlu0 %v438, 17
      %v442 = vpop.permute.xlu0 %441
      %vm443 = vcmask 138240
      %v444 = vsel %vm443, %v440, %v442
      %vm446 = vcmask 138240
      %v449 = vsel %vm446, 0, %v440
      %v452 = vsel %vm446, %v442, 0
      %v454 = vsel %vm417, 1, 0
      %v455 = vsel %vm418, 1, 0
      %vm456 = vcmp.eq.s32.totalorder %v454, 1
      %vm457 = vcmp.eq.s32.totalorder %v455, 1
      %vm458 = vmpackc.low %vm457, %vm456
      %v459 = vsel %vm458, 65537, 0
      %v460 = vperm.slane %v459, 0
      %v461 = vperm.slane %v459, 4
      %v462 = vunpack.c.l.b16 %v460
      %v463 = vunpack.c.h.b16 %v460
      %v464 = vunpack.c.l.b16 0
      %v465 = vunpack.c.h.b16 0
      %vm466 = vcmp.ne.s32.totalorder %v462, %v464
      %vm467 = vcmp.ne.s32.totalorder %v463, %v465
      %vm468 = vmpackc.low %vm467, %vm466
      %v469 = vunpack.c.l.b16 %v461
      %v470 = vunpack.c.h.b16 %v461
      %v471 = vunpack.c.l.b16 0
      %v472 = vunpack.c.h.b16 0
      %vm473 = vcmp.ne.s32.totalorder %v469, %v471
      %vm474 = vcmp.ne.s32.totalorder %v470, %v472
      %vm475 = vmpackc.low %vm474, %vm473
      %v476 = vsel %vm468, %v449, 0
      %v477 = vsel %vm475, %v444, 0
      %v478 = vsel %vm419, 1, 0
      %v479 = vsel %vm420, 1, 0
      %vm480 = vcmp.eq.s32.totalorder %v478, 1
      %vm481 = vcmp.eq.s32.totalorder %v479, 1
      %vm482 = vmpackc.low %vm481, %vm480
      %v483 = vsel %vm482, 65537, 0
      %v484 = vperm.slane %v483, 0
      %v485 = vperm.slane %v483, 4
      %486 = vrot.lane.b32.xlu0 %v484, 2
      %v487 = vpop.permute.xlu0 %486
      %488 = vrot.lane.b32.xlu0 %v485, 2
      %v489 = vpop.permute.xlu0 %488
      %vm490 = vcmask 15360
      %v491 = vsel %vm490, %v487, %v489
      %v492 = vunpack.c.l.b16 %v487
      %v493 = vunpack.c.h.b16 %v487
      %v494 = vunpack.c.l.b16 0
      %v495 = vunpack.c.h.b16 0
      %vm496 = vcmp.ne.s32.totalorder %v492, %v494
      %vm497 = vcmp.ne.s32.totalorder %v493, %v495
      %vm498 = vmpackc.low %vm497, %vm496
      %v499 = vunpack.c.l.b16 %v491
      %v500 = vunpack.c.h.b16 %v491
      %v501 = vunpack.c.l.b16 0
      %v502 = vunpack.c.h.b16 0
      %vm503 = vcmp.ne.s32.totalorder %v499, %v501
      %vm504 = vcmp.ne.s32.totalorder %v500, %v502
      %vm505 = vmpackc.low %vm504, %vm503
      %v506 = vunpack.c.l.b16 %v489
      %v507 = vunpack.c.h.b16 %v489
      %v508 = vunpack.c.l.b16 0
      %v509 = vunpack.c.h.b16 0
      %vm510 = vcmp.ne.s32.totalorder %v506, %v508
      %vm511 = vcmp.ne.s32.totalorder %v507, %v509
      %vm512 = vmpackc.low %vm511, %vm510
      %v513 = vsel %vm498, %v449, 0
      %v514 = vsel %vm505, %v444, 0
      %v515 = vsel %vm512, %v452, 0
      %516 = vrot.lane.b32.xlu0 %v460, 16
      %v517 = vpop.permute.xlu0 %516
      %518 = vrot.lane.b32.xlu0 %v461, 16
      %v519 = vpop.permute.xlu0 %518
      %vm520 = vcmask 130048
      %v521 = vsel %vm520, %v517, %v519
      %v522 = vunpack.c.l.b16 %v517
      %v523 = vunpack.c.h.b16 %v517
      %v524 = vunpack.c.l.b16 0
      %v525 = vunpack.c.h.b16 0
      %vm526 = vcmp.ne.s32.totalorder %v522, %v524
      %vm527 = vcmp.ne.s32.totalorder %v523, %v525
      %vm528 = vmpackc.low %vm527, %vm526
      %v529 = vunpack.c.l.b16 %v521
      %v530 = vunpack.c.h.b16 %v521
      %v531 = vunpack.c.l.b16 0
      %v532 = vunpack.c.h.b16 0
      %vm533 = vcmp.ne.s32.totalorder %v529, %v531
      %vm534 = vcmp.ne.s32.totalorder %v530, %v532
      %vm535 = vmpackc.low %vm534, %vm533
      %v536 = vunpack.c.l.b16 %v519
      %v537 = vunpack.c.h.b16 %v519
      %v538 = vunpack.c.l.b16 0
      %v539 = vunpack.c.h.b16 0
      %vm540 = vcmp.ne.s32.totalorder %v536, %v538
      %vm541 = vcmp.ne.s32.totalorder %v537, %v539
      %vm542 = vmpackc.low %vm541, %vm540
      %v543 = vsel %vm528, %v449, 0
      %v544 = vsel %vm535, %v444, 0
      %v545 = vsel %vm542, %v452, 0
      %546 = vrot.lane.b32.xlu0 %v484, 18
      %v547 = vpop.permute.xlu0 %546
      %548 = vrot.lane.b32.xlu0 %v485, 18
      %v549 = vpop.permute.xlu0 %548
      %vm550 = vcmask 146432
      %v551 = vsel %vm550, %v547, %v549
      %v552 = vunpack.c.l.b16 %v547
      %v553 = vunpack.c.h.b16 %v547
      %v554 = vunpack.c.l.b16 0
      %v555 = vunpack.c.h.b16 0
      %vm556 = vcmp.ne.s32.totalorder %v552, %v554
      %vm557 = vcmp.ne.s32.totalorder %v553, %v555
      %vm558 = vmpackc.low %vm557, %vm556
      %v559 = vunpack.c.l.b16 %v551
      %v560 = vunpack.c.h.b16 %v551
      %v561 = vunpack.c.l.b16 0
      %v562 = vunpack.c.h.b16 0
      %vm563 = vcmp.ne.s32.totalorder %v559, %v561
      %vm564 = vcmp.ne.s32.totalorder %v560, %v562
      %vm565 = vmpackc.low %vm564, %vm563
      %v566 = vunpack.c.l.b16 %v549
      %v567 = vunpack.c.h.b16 %v549
      %v568 = vunpack.c.l.b16 0
      %v569 = vunpack.c.h.b16 0
      %vm570 = vcmp.ne.s32.totalorder %v566, %v568
      %vm571 = vcmp.ne.s32.totalorder %v567, %v569
      %vm572 = vmpackc.low %vm571, %vm570
      %v573 = vsel %vm558, %v449, 0
      %v574 = vsel %vm565, %v444, 0
      %v575 = vsel %vm572, %v452, 0
      %576 = vrot.lane.b32.xlu0 %v460, 32
      %v577 = vpop.permute.xlu0 %576
      %578 = vrot.lane.b32.xlu0 %v461, 32
      %v579 = vpop.permute.xlu0 %578
      %vm580 = vcmask 261120
      %v581 = vsel %vm580, %v577, %v579
      %v582 = vunpack.c.l.b16 %v577
      %v583 = vunpack.c.h.b16 %v577
      %v584 = vunpack.c.l.b16 0
      %v585 = vunpack.c.h.b16 0
      %vm586 = vcmp.ne.s32.totalorder %v582, %v584
      %vm587 = vcmp.ne.s32.totalorder %v583, %v585
      %vm588 = vmpackc.low %vm587, %vm586
      %v589 = vunpack.c.l.b16 %v581
      %v590 = vunpack.c.h.b16 %v581
      %v591 = vunpack.c.l.b16 0
      %v592 = vunpack.c.h.b16 0
      %vm593 = vcmp.ne.s32.totalorder %v589, %v591
      %vm594 = vcmp.ne.s32.totalorder %v590, %v592
      %vm595 = vmpackc.low %vm594, %vm593
      %v596 = vunpack.c.l.b16 %v579
      %v597 = vunpack.c.h.b16 %v579
      %v598 = vunpack.c.l.b16 0
      %v599 = vunpack.c.h.b16 0
      %vm600 = vcmp.ne.s32.totalorder %v596, %v598
      %vm601 = vcmp.ne.s32.totalorder %v597, %v599
      %vm602 = vmpackc.low %vm601, %vm600
      %v603 = vsel %vm588, %v449, 0
      %v604 = vsel %vm595, %v444, 0
      %v605 = vsel %vm602, %v452, 0
      %606 = vrot.lane.b32.xlu0 %v484, 34
      %v607 = vpop.permute.xlu0 %606
      %608 = vrot.lane.b32.xlu0 %v485, 34
      %v609 = vpop.permute.xlu0 %608
      %vm610 = vcmask 277504
      %v611 = vsel %vm610, %v607, %v609
      %v612 = vunpack.c.l.b16 %v607
      %v613 = vunpack.c.h.b16 %v607
      %v614 = vunpack.c.l.b16 0
      %v615 = vunpack.c.h.b16 0
      %vm616 = vcmp.ne.s32.totalorder %v612, %v614
      %vm617 = vcmp.ne.s32.totalorder %v613, %v615
      %vm618 = vmpackc.low %vm617, %vm616
      %v619 = vunpack.c.l.b16 %v611
      %v620 = vunpack.c.h.b16 %v611
      %v621 = vunpack.c.l.b16 0
      %v622 = vunpack.c.h.b16 0
      %vm623 = vcmp.ne.s32.totalorder %v619, %v621
      %vm624 = vcmp.ne.s32.totalorder %v620, %v622
      %vm625 = vmpackc.low %vm624, %vm623
      %v626 = vunpack.c.l.b16 %v609
      %v627 = vunpack.c.h.b16 %v609
      %v628 = vunpack.c.l.b16 0
      %v629 = vunpack.c.h.b16 0
      %vm630 = vcmp.ne.s32.totalorder %v626, %v628
      %vm631 = vcmp.ne.s32.totalorder %v627, %v629
      %vm632 = vmpackc.low %vm631, %vm630
      %v633 = vsel %vm618, %v449, 0
      %v634 = vsel %vm625, %v444, 0
      %v635 = vsel %vm632, %v452, 0
      %638 = vrot.lane.b32.xlu0 %v449, 127
      %v639 = vpop.permute.xlu0 %638
      %640 = vrot.lane.b32.xlu0 %v444, 127
      %v641 = vpop.permute.xlu0 %640
      %642 = vrot.lane.b32.xlu0 %v452, 127
      %v643 = vpop.permute.xlu0 %642
      %vm644 = vcmask 1039360
      %v645 = vsel %vm644, %v639, %v641
      %v646 = vsel %vm644, %v641, %v643
      %652 = vrot.lane.b32.xlu0 %v513, 126
      %v653 = vpop.permute.xlu0 %652
      %654 = vrot.lane.b32.xlu0 %v514, 126
      %v655 = vpop.permute.xlu0 %654
      %656 = vrot.lane.b32.xlu0 %v515, 126
      %v657 = vpop.permute.xlu0 %656
      %vm658 = vcmask 1031168
      %v659 = vsel %vm658, %v653, %v655
      %v660 = vsel %vm658, %v655, %v657
      %666 = vrot.lane.b32.xlu0 %v543, 112
      %v667 = vpop.permute.xlu0 %666
      %668 = vrot.lane.b32.xlu0 %v544, 112
      %v669 = vpop.permute.xlu0 %668
      %670 = vrot.lane.b32.xlu0 %v545, 112
      %v671 = vpop.permute.xlu0 %670
      %vm672 = vcmask 916480
      %v673 = vsel %vm672, %v667, %v669
      %v674 = vsel %vm672, %v669, %v671
      %677 = vrot.lane.b32.xlu0 %v449, 111
      %v678 = vpop.permute.xlu0 %677
      %679 = vrot.lane.b32.xlu0 %v444, 111
      %v680 = vpop.permute.xlu0 %679
      %681 = vrot.lane.b32.xlu0 %v452, 111
      %v682 = vpop.permute.xlu0 %681
      %vm683 = vcmask 908288
      %v684 = vsel %vm683, %v678, %v680
      %v685 = vsel %vm683, %v680, %v682
      %691 = vrot.lane.b32.xlu0 %v573, 110
      %v692 = vpop.permute.xlu0 %691
      %693 = vrot.lane.b32.xlu0 %v574, 110
      %v694 = vpop.permute.xlu0 %693
      %695 = vrot.lane.b32.xlu0 %v575, 110
      %v696 = vpop.permute.xlu0 %695
      %vm697 = vcmask 900096
      %v698 = vsel %vm697, %v692, %v694
      %v699 = vsel %vm697, %v694, %v696
      %705 = vrot.lane.b32.xlu0 %v603, 96
      %v706 = vpop.permute.xlu0 %705
      %707 = vrot.lane.b32.xlu0 %v604, 96
      %v708 = vpop.permute.xlu0 %707
      %709 = vrot.lane.b32.xlu0 %v605, 96
      %v710 = vpop.permute.xlu0 %709
      %vm711 = vcmask 785408
      %v712 = vsel %vm711, %v706, %v708
      %v713 = vsel %vm711, %v708, %v710
      %716 = vrot.lane.b32.xlu0 %v449, 95
      %v717 = vpop.permute.xlu0 %716
      %718 = vrot.lane.b32.xlu0 %v444, 95
      %v719 = vpop.permute.xlu0 %718
      %720 = vrot.lane.b32.xlu0 %v452, 95
      %v721 = vpop.permute.xlu0 %720
      %vm722 = vcmask 777216
      %v723 = vsel %vm722, %v717, %v719
      %v724 = vsel %vm722, %v719, %v721
      %730 = vrot.lane.b32.xlu0 %v633, 94
      %v731 = vpop.permute.xlu0 %730
      %732 = vrot.lane.b32.xlu0 %v634, 94
      %v733 = vpop.permute.xlu0 %732
      %734 = vrot.lane.b32.xlu0 %v635, 94
      %v735 = vpop.permute.xlu0 %734
      %vm736 = vcmask 769024
      %v737 = vsel %vm736, %v731, %v733
      %v738 = vsel %vm736, %v733, %v735
      %742 = vset.pattern.permute.xlu0 0
      %743 = vperm.xlu0 %742, %v427
      %v744 = vpop.permute.xlu0 %743
      %747 = vset.pattern.permute.xlu0 0
      %748 = vperm.xlu0 %747, %v428
      %v749 = vpop.permute.xlu0 %748
      %v753 = vunpack.c.l.b16 %v425
      %v754 = vunpack.c.h.b16 %v425
      %v755 = vunpack.c.l.b16 %v426
      %v756 = vunpack.c.h.b16 %v426
      %v757 = vpack.c.b16 %v755, %v753
      %v758 = vpack.c.b16 %v756, %v754
      %vm760 = vcmask 130048
      %v762 = vsel %vm760, %v758, 0
      %764 = vmatpush.bf16.msra.mxu0 %v723
      %765 = vmatpush.bf16.msra.mxu0 %v712
      %766 = vmatpush.bf16.msra.mxu0 %v698
      %767 = vmatpush.bf16.msra.mxu0 %v684
      %768 = vmatpush.bf16.msra.mxu0 %v673
      %769 = vmatpush.bf16.msra.mxu0 %v659
      %770 = vmatpush.bf16.msra.mxu0 %v645
      %771 = vmatpush.bf16.msra.mxu0 %v476
      %772 = vmatmul.bf16.gmra.mxu0 %v757
      %v773 = vpop.f32.mrf.mxu0
      %v774 = vadd.f32 %v744, %v773
      %v775 = vpop.f32.mrf.mxu0
      %v776 = vadd.f32 %v749, %v775
      %777 = vdwg.mxu0
      %778 = vmatpush.bf16.msra.mxu0 0
      %779 = vmatpush.bf16.msra.mxu0 0
      %780 = vmatpush.bf16.msra.mxu0 0
      %781 = vmatpush.bf16.msra.mxu0 0
      %782 = vmatpush.bf16.msra.mxu0 0
      %783 = vmatpush.bf16.msra.mxu0 0
      %784 = vmatpush.bf16.msra.mxu0 0
      %785 = vmatpush.bf16.msra.mxu0 %v737
      %786 = vmatmul.bf16.gmra.mxu0 %v762
      %v787 = vpop.f32.mrf.mxu0
      %v788 = vadd.f32 %v774, %v787
      %v789 = vpop.f32.mrf.mxu0
      %v790 = vadd.f32 %v776, %v789
      %791 = vdwg.mxu0
      %792 = vmatpush.bf16.msra.mxu0 %v724
      %793 = vmatpush.bf16.msra.mxu0 %v713
      %794 = vmatpush.bf16.msra.mxu0 %v699
      %795 = vmatpush.bf16.msra.mxu0 %v685
      %796 = vmatpush.bf16.msra.mxu0 %v674
      %797 = vmatpush.bf16.msra.mxu0 %v660
      %798 = vmatpush.bf16.msra.mxu0 %v646
      %799 = vmatpush.bf16.msra.mxu0 %v477
      %800 = vmatmul.bf16.gmra.mxu0 %v757
      %v801 = vpop.f32.mrf.mxu0
      %v802 = vadd.f32 %v744, %v801
      %v803 = vpop.f32.mrf.mxu0
      %v804 = vadd.f32 %v749, %v803
      %805 = vdwg.mxu0
      %806 = vmatpush.bf16.msra.mxu0 0
      %807 = vmatpush.bf16.msra.mxu0 0
      %808 = vmatpush.bf16.msra.mxu0 0
      %809 = vmatpush.bf16.msra.mxu0 0
      %810 = vmatpush.bf16.msra.mxu0 0
      %811 = vmatpush.bf16.msra.mxu0 0
      %812 = vmatpush.bf16.msra.mxu0 0
      %813 = vmatpush.bf16.msra.mxu0 %v738
      %814 = vmatmul.bf16.gmra.mxu0 %v762
      %v815 = vpop.f32.mrf.mxu0
      %v816 = vadd.f32 %v802, %v815
      %v817 = vpop.f32.mrf.mxu0
      %v818 = vadd.f32 %v804, %v817
      %819 = vdwg.mxu0
      %v820 = vmax.f32 %v788, 0.0
      %v821 = vmax.f32 %v816, 0.0
      %v822 = vmax.f32 %v790, 0.0
      %v823 = vmax.f32 %v818, 0.0
      %v824 = vld [vmem:[%s3] sm:$0xff]
      %v825 = vld [vmem:[%s3 + $0x8] sm:$0xff]
      %v826 = vld [vmem:[%s4] sm:$0xff]
      %v827 = vld [vmem:[%s4 + $0x8] sm:$0xff]
      %v828 = vpack.c.bf16 %v821, %v820
      %v829 = vpack.c.bf16 %v823, %v822
      %v832 = vunpack.c.l.b16 %v828
      %v833 = vunpack.c.h.b16 %v828
      %v834 = vunpack.c.l.b16 %v829
      %v835 = vunpack.c.h.b16 %v829
      %v836 = vpack.c.b16 %v834, %v832
      %v837 = vpack.c.b16 %v835, %v833
      %838 = vrot.lane.b32.xlu0 %v836, 17
      %v839 = vpop.permute.xlu0 %838
      %840 = vrot.lane.b32.xlu0 %v837, 17
      %v841 = vpop.permute.xlu0 %840
      %v842 = vsel %vm443, %v839, %v841
      %v845 = vsel %vm446, 0, %v839
      %v848 = vsel %vm446, %v841, 0
      %v850 = vsel %vm468, %v845, 0
      %v851 = vsel %vm475, %v842, 0
      %v852 = vsel %vm498, %v845, 0
      %v853 = vsel %vm505, %v842, 0
      %v854 = vsel %vm512, %v848, 0
      %v855 = vsel %vm528, %v845, 0
      %v856 = vsel %vm535, %v842, 0
      %v857 = vsel %vm542, %v848, 0
      %v858 = vsel %vm558, %v845, 0
      %v859 = vsel %vm565, %v842, 0
      %v860 = vsel %vm572, %v848, 0
      %v861 = vsel %vm588, %v845, 0
      %v862 = vsel %vm595, %v842, 0
      %v863 = vsel %vm602, %v848, 0
      %v864 = vsel %vm618, %v845, 0
      %v865 = vsel %vm625, %v842, 0
      %v866 = vsel %vm632, %v848, 0
      %869 = vrot.lane.b32.xlu0 %v845, 127
      %v870 = vpop.permute.xlu0 %869
      %871 = vrot.lane.b32.xlu0 %v842, 127
      %v872 = vpop.permute.xlu0 %871
      %873 = vrot.lane.b32.xlu0 %v848, 127
      %v874 = vpop.permute.xlu0 %873
      %v875 = vsel %vm644, %v870, %v872
      %v876 = vsel %vm644, %v872, %v874
      %882 = vrot.lane.b32.xlu0 %v852, 126
      %v883 = vpop.permute.xlu0 %882
      %884 = vrot.lane.b32.xlu0 %v853, 126
      %v885 = vpop.permute.xlu0 %884
      %886 = vrot.lane.b32.xlu0 %v854, 126
      %v887 = vpop.permute.xlu0 %886
      %v888 = vsel %vm658, %v883, %v885
      %v889 = vsel %vm658, %v885, %v887
      %895 = vrot.lane.b32.xlu0 %v855, 112
      %v896 = vpop.permute.xlu0 %895
      %897 = vrot.lane.b32.xlu0 %v856, 112
      %v898 = vpop.permute.xlu0 %897
      %899 = vrot.lane.b32.xlu0 %v857, 112
      %v900 = vpop.permute.xlu0 %899
      %v901 = vsel %vm672, %v896, %v898
      %v902 = vsel %vm672, %v898, %v900
      %905 = vrot.lane.b32.xlu0 %v845, 111
      %v906 = vpop.permute.xlu0 %905
      %907 = vrot.lane.b32.xlu0 %v842, 111
      %v908 = vpop.permute.xlu0 %907
      %909 = vrot.lane.b32.xlu0 %v848, 111
      %v910 = vpop.permute.xlu0 %909
      %v911 = vsel %vm683, %v906, %v908
      %v912 = vsel %vm683, %v908, %v910
      %918 = vrot.lane.b32.xlu0 %v858, 110
      %v919 = vpop.permute.xlu0 %918
      %920 = vrot.lane.b32.xlu0 %v859, 110
      %v921 = vpop.permute.xlu0 %920
      %922 = vrot.lane.b32.xlu0 %v860, 110
      %v923 = vpop.permute.xlu0 %922
      %v924 = vsel %vm697, %v919, %v921
      %v925 = vsel %vm697, %v921, %v923
      %931 = vrot.lane.b32.xlu0 %v861, 96
      %v932 = vpop.permute.xlu0 %931
      %933 = vrot.lane.b32.xlu0 %v862, 96
      %v934 = vpop.permute.xlu0 %933
      %935 = vrot.lane.b32.xlu0 %v863, 96
      %v936 = vpop.permute.xlu0 %935
      %v937 = vsel %vm711, %v932, %v934
      %v938 = vsel %vm711, %v934, %v936
      %941 = vrot.lane.b32.xlu0 %v845, 95
      %v942 = vpop.permute.xlu0 %941
      %943 = vrot.lane.b32.xlu0 %v842, 95
      %v944 = vpop.permute.xlu0 %943
      %945 = vrot.lane.b32.xlu0 %v848, 95
      %v946 = vpop.permute.xlu0 %945
      %v947 = vsel %vm722, %v942, %v944
      %v948 = vsel %vm722, %v944, %v946
      %954 = vrot.lane.b32.xlu0 %v864, 94
      %v955 = vpop.permute.xlu0 %954
      %956 = vrot.lane.b32.xlu0 %v865, 94
      %v957 = vpop.permute.xlu0 %956
      %958 = vrot.lane.b32.xlu0 %v866, 94
      %v959 = vpop.permute.xlu0 %958
      %v960 = vsel %vm736, %v955, %v957
      %v961 = vsel %vm736, %v957, %v959
      %965 = vset.pattern.permute.xlu0 0
      %966 = vperm.xlu0 %965, %v826
      %v967 = vpop.permute.xlu0 %966
      %970 = vset.pattern.permute.xlu0 0
      %971 = vperm.xlu0 %970, %v827
      %v972 = vpop.permute.xlu0 %971
      %v976 = vunpack.c.l.b16 %v824
      %v977 = vunpack.c.h.b16 %v824
      %v978 = vunpack.c.l.b16 %v825
      %v979 = vunpack.c.h.b16 %v825
      %v980 = vpack.c.b16 %v978, %v976
      %v981 = vpack.c.b16 %v979, %v977
      %v984 = vsel %vm760, %v981, 0
      %986 = vmatpush.bf16.msra.mxu0 %v947
      %987 = vmatpush.bf16.msra.mxu0 %v937
      %988 = vmatpush.bf16.msra.mxu0 %v924
      %989 = vmatpush.bf16.msra.mxu0 %v911
      %990 = vmatpush.bf16.msra.mxu0 %v901
      %991 = vmatpush.bf16.msra.mxu0 %v888
      %992 = vmatpush.bf16.msra.mxu0 %v875
      %993 = vmatpush.bf16.msra.mxu0 %v850
      %994 = vmatmul.bf16.gmra.mxu0 %v980
      %v995 = vpop.f32.mrf.mxu0
      %v996 = vadd.f32 %v967, %v995
      %v997 = vpop.f32.mrf.mxu0
      %v998 = vadd.f32 %v972, %v997
      %999 = vdwg.mxu0
      %1000 = vmatpush.bf16.msra.mxu0 0
      %1001 = vmatpush.bf16.msra.mxu0 0
      %1002 = vmatpush.bf16.msra.mxu0 0
      %1003 = vmatpush.bf16.msra.mxu0 0
      %1004 = vmatpush.bf16.msra.mxu0 0
      %1005 = vmatpush.bf16.msra.mxu0 0
      %1006 = vmatpush.bf16.msra.mxu0 0
      %1007 = vmatpush.bf16.msra.mxu0 %v960
      %1008 = vmatmul.bf16.gmra.mxu0 %v984
      %v1009 = vpop.f32.mrf.mxu0
      %v1010 = vadd.f32 %v996, %v1009
      %v1011 = vpop.f32.mrf.mxu0
      %v1012 = vadd.f32 %v998, %v1011
      %1013 = vdwg.mxu0
      %1014 = vmatpush.bf16.msra.mxu0 %v948
      %1015 = vmatpush.bf16.msra.mxu0 %v938
      %1016 = vmatpush.bf16.msra.mxu0 %v925
      %1017 = vmatpush.bf16.msra.mxu0 %v912
      %1018 = vmatpush.bf16.msra.mxu0 %v902
      %1019 = vmatpush.bf16.msra.mxu0 %v889
      %1020 = vmatpush.bf16.msra.mxu0 %v876
      %1021 = vmatpush.bf16.msra.mxu0 %v851
      %1022 = vmatmul.bf16.gmra.mxu0 %v980
      %v1023 = vpop.f32.mrf.mxu0
      %v1024 = vadd.f32 %v967, %v1023
      %v1025 = vpop.f32.mrf.mxu0
      %v1026 = vadd.f32 %v972, %v1025
      %1027 = vdwg.mxu0
      %1028 = vmatpush.bf16.msra.mxu0 0
      %1029 = vmatpush.bf16.msra.mxu0 0
      %1030 = vmatpush.bf16.msra.mxu0 0
      %1031 = vmatpush.bf16.msra.mxu0 0
      %1032 = vmatpush.bf16.msra.mxu0 0
      %1033 = vmatpush.bf16.msra.mxu0 0
      %1034 = vmatpush.bf16.msra.mxu0 0
      %1035 = vmatpush.bf16.msra.mxu0 %v961
      %1036 = vmatmul.bf16.gmra.mxu0 %v984
      %v1037 = vpop.f32.mrf.mxu0
      %v1038 = vadd.f32 %v1024, %v1037
      %v1039 = vpop.f32.mrf.mxu0
      %v1040 = vadd.f32 %v1026, %v1039
      %1041 = vdwg.mxu0
      %v1042 = vadd.f32 %v1010, %v1038
      %1043 = vadd.xlane.f32.xlu0 %v1042
      %v1044 = vpop.xlane.xlu0 %1043
      %v1045 = vadd.f32 %v1012, %v1040
      %1046 = vadd.xlane.f32.xlu0 %v1045
      %v1047 = vpop.xlane.xlu0 %1046
      %v1048 = vrcp.pop 256.0
      %v1049 = vmul.f32 256.0, %v1048
      %v1050 = vsub.f32 1.0, %v1049
      %v1051 = vmul.f32 %v1048, %v1050
      %v1052 = vadd.f32 %v1048, %v1051
      %vm1053 = vweird.f32 %v1048
      %v1054 = vsel %vm1053, %v1048, %v1052
      %v1055 = vmul.f32 %v1044, %v1054
      %v1056 = vmul.f32 %v1047, %v1054
      %v1057 = vld [vmem:[%s5] sm:$0xff]
      %v1058 = vld [vmem:[%s5 + $0x8] sm:$0xff]
      %v1059 = vmul.f32 %v1057, %v1055
      %v1060 = vmul.f32 %v1058, %v1056
      %vm1061 = vcmask 31744
      %v1062 = vsel %vm1061, %v1059, 0.0
      %v1063 = vsel %vm1061, %v1060, 0.0
      %v1064 = vadd.f32 %v1062, %v1063
      %v1065 = vrot.slane %v1064, 4
      %v1066 = vadd.f32 %v1064, %v1065
      %v1067 = vrot.slane %v1066, 2
      %v1068 = vadd.f32 %v1066, %v1067
      %v1069 = vrot.slane %v1068, 1
      %v1070 = vadd.f32 %v1068, %v1069
      %v1071 = vld [vmem:[%s6] sm:$0x1]
      %v1072 = vadd.f32 %v1070, %v1071
      %v1073 = vmax.f32 %v1072, 0.0
      %v1074 = vld [vmem:[%s7] sm:$0xff]
      %v1075 = vld [vmem:[%s7 + $0x8] sm:$0xff]
      %v1076 = vperm.slane %v1073, 0
      %v1077 = vmul.f32 %v1074, %v1076
      %v1078 = vmul.f32 %v1075, %v1076
      %v1079 = vsel %vm1061, %v1077, 0.0
      %1080 = vadd.xlane.f32.xlu0 %v1079
      %v1081 = vpop.xlane.xlu0 %1080
      %v1082 = vsel %vm1061, %v1078, 0.0
      %1083 = vadd.xlane.f32.xlu0 %v1082
      %v1084 = vpop.xlane.xlu0 %1083
      %v1085 = vld [vmem:[%s8] sm:$0xff]
      %v1086 = vld [vmem:[%s8 + $0x8] sm:$0xff]
      %v1087 = vadd.f32 %v1081, %v1085
      %v1088 = vadd.f32 %v1084, %v1086
      %v1089 = vxor.u32 %v1087, 2147483648
      %v1090 = vxor.u32 %v1088, 2147483648
      %v1091 = vmul.f32 %v1089, 1.442695
      %v1092 = vpow.pop %v1091
      %v1093 = vmul.f32 %v1090, 1.442695
      %v1094 = vpow.pop %v1093
      %v1095 = vadd.f32 %v1092, 1.0
      %v1096 = vadd.f32 %v1094, 1.0
      %v1097 = vrcp.pop %v1095
      %v1098 = vmul.f32 %v1095, %v1097
      %v1099 = vsub.f32 1.0, %v1098
      %v1100 = vmul.f32 %v1097, %v1099
      %v1101 = vadd.f32 %v1097, %v1100
      %vm1102 = vweird.f32 %v1095
      %vm1103 = vweird.f32 %v1097
      %vm1104 = vmor %vm1102, %vm1103
      %v1105 = vsel %vm1104, %v1097, %v1101
      %v1106 = vand.u32 2147483647, %v1095
      %vm1107 = vcmp.eq.f32.partialorder %v1106, 8.507059e+37
      %v1108 = vand.u32 %v1095, 2147483648
      %v1109 = vor.u32 1.1754944e-38, %v1108
      %v1110 = vsel %vm1107, %v1109, %v1105
      %v1111 = vmul.f32 1.0, %v1110
      %v1112 = vrcp.pop %v1096
      %v1113 = vmul.f32 %v1096, %v1112
      %v1114 = vsub.f32 1.0, %v1113
      %v1115 = vmul.f32 %v1112, %v1114
      %v1116 = vadd.f32 %v1112, %v1115
      %vm1117 = vweird.f32 %v1096
      %vm1118 = vweird.f32 %v1112
      %vm1119 = vmor %vm1117, %vm1118
      %v1120 = vsel %vm1119, %v1112, %v1116
      %v1121 = vand.u32 2147483647, %v1096
      %vm1122 = vcmp.eq.f32.partialorder %v1121, 8.507059e+37
      %v1123 = vand.u32 %v1096, 2147483648
      %v1124 = vor.u32 1.1754944e-38, %v1123
      %v1125 = vsel %vm1122, %v1124, %v1120
      %v1126 = vmul.f32 1.0, %v1125
      %1128 = vset.pattern.permute.xlu0 0
      %1129 = vperm.xlu0 %1128, %v1111
      %v1130 = vpop.permute.xlu0 %1129
      %1133 = vset.pattern.permute.xlu0 0
      %1134 = vperm.xlu0 %1133, %v1126
      %v1135 = vpop.permute.xlu0 %1134
      %v1137 = vmul.f32 %v1010, %v1130
      %v1138 = vmul.f32 %v1038, %v1130
      %v1139 = vmul.f32 %v1012, %v1135
      %v1140 = vmul.f32 %v1040, %v1135
      %v1141 = vadd.f32 %v1137, %v421
      %v1142 = vadd.f32 %v1138, %v422
      %v1143 = vadd.f32 %v1139, %v423
      %v1144 = vadd.f32 %v1140, %v424
      %s1145 = scalar_lea.vmem %s1, 16
      %v1146 = vld [vmem:[%s1145] sm:$0xff]
      %v1147 = vld [vmem:[%s1145 + $0x8] sm:$0xff]
      %s1148 = scalar_lea.vmem %s2, 16
      %v1149 = vld [vmem:[%s1148] sm:$0xff]
      %v1150 = vld [vmem:[%s1148 + $0x8] sm:$0xff]
      %v1151 = vpack.c.bf16 %v1142, %v1141
      %v1152 = vpack.c.bf16 %v1144, %v1143
      %v1155 = vunpack.c.l.b16 %v1151
      %v1156 = vunpack.c.h.b16 %v1151
      %v1157 = vunpack.c.l.b16 %v1152
      %v1158 = vunpack.c.h.b16 %v1152
      %v1159 = vpack.c.b16 %v1157, %v1155
      %v1160 = vpack.c.b16 %v1158, %v1156
      %1161 = vrot.lane.b32.xlu0 %v1159, 17
      %v1162 = vpop.permute.xlu0 %1161
      %1163 = vrot.lane.b32.xlu0 %v1160, 17
      %v1164 = vpop.permute.xlu0 %1163
      %v1165 = vsel %vm443, %v1162, %v1164
      %v1168 = vsel %vm446, 0, %v1162
      %v1171 = vsel %vm446, %v1164, 0
      %v1173 = vsel %vm468, %v1168, 0
      %v1174 = vsel %vm475, %v1165, 0
      %v1175 = vsel %vm498, %v1168, 0
      %v1176 = vsel %vm505, %v1165, 0
      %v1177 = vsel %vm512, %v1171, 0
      %v1178 = vsel %vm528, %v1168, 0
      %v1179 = vsel %vm535, %v1165, 0
      %v1180 = vsel %vm542, %v1171, 0
      %v1181 = vsel %vm558, %v1168, 0
      %v1182 = vsel %vm565, %v1165, 0
      %v1183 = vsel %vm572, %v1171, 0
      %v1184 = vsel %vm588, %v1168, 0
      %v1185 = vsel %vm595, %v1165, 0
      %v1186 = vsel %vm602, %v1171, 0
      %v1187 = vsel %vm618, %v1168, 0
      %v1188 = vsel %vm625, %v1165, 0
      %v1189 = vsel %vm632, %v1171, 0
      %1192 = vrot.lane.b32.xlu0 %v1168, 127
      %v1193 = vpop.permute.xlu0 %1192
      %1194 = vrot.lane.b32.xlu0 %v1165, 127
      %v1195 = vpop.permute.xlu0 %1194
      %1196 = vrot.lane.b32.xlu0 %v1171, 127
      %v1197 = vpop.permute.xlu0 %1196
      %v1198 = vsel %vm644, %v1193, %v1195
      %v1199 = vsel %vm644, %v1195, %v1197
      %1205 = vrot.lane.b32.xlu0 %v1175, 126
      %v1206 = vpop.permute.xlu0 %1205
      %1207 = vrot.lane.b32.xlu0 %v1176, 126
      %v1208 = vpop.permute.xlu0 %1207
      %1209 = vrot.lane.b32.xlu0 %v1177, 126
      %v1210 = vpop.permute.xlu0 %1209
      %v1211 = vsel %vm658, %v1206, %v1208
      %v1212 = vsel %vm658, %v1208, %v1210
      %1218 = vrot.lane.b32.xlu0 %v1178, 112
      %v1219 = vpop.permute.xlu0 %1218
      %1220 = vrot.lane.b32.xlu0 %v1179, 112
      %v1221 = vpop.permute.xlu0 %1220
      %1222 = vrot.lane.b32.xlu0 %v1180, 112
      %v1223 = vpop.permute.xlu0 %1222
      %v1224 = vsel %vm672, %v1219, %v1221
      %v1225 = vsel %vm672, %v1221, %v1223
      %1228 = vrot.lane.b32.xlu0 %v1168, 111
      %v1229 = vpop.permute.xlu0 %1228
      %1230 = vrot.lane.b32.xlu0 %v1165, 111
      %v1231 = vpop.permute.xlu0 %1230
      %1232 = vrot.lane.b32.xlu0 %v1171, 111
      %v1233 = vpop.permute.xlu0 %1232
      %v1234 = vsel %vm683, %v1229, %v1231
      %v1235 = vsel %vm683, %v1231, %v1233
      %1241 = vrot.lane.b32.xlu0 %v1181, 110
      %v1242 = vpop.permute.xlu0 %1241
      %1243 = vrot.lane.b32.xlu0 %v1182, 110
      %v1244 = vpop.permute.xlu0 %1243
      %1245 = vrot.lane.b32.xlu0 %v1183, 110
      %v1246 = vpop.permute.xlu0 %1245
      %v1247 = vsel %vm697, %v1242, %v1244
      %v1248 = vsel %vm697, %v1244, %v1246
      %1254 = vrot.lane.b32.xlu0 %v1184, 96
      %v1255 = vpop.permute.xlu0 %1254
      %1256 = vrot.lane.b32.xlu0 %v1185, 96
      %v1257 = vpop.permute.xlu0 %1256
      %1258 = vrot.lane.b32.xlu0 %v1186, 96
      %v1259 = vpop.permute.xlu0 %1258
      %v1260 = vsel %vm711, %v1255, %v1257
      %v1261 = vsel %vm711, %v1257, %v1259
      %1264 = vrot.lane.b32.xlu0 %v1168, 95
      %v1265 = vpop.permute.xlu0 %1264
      %1266 = vrot.lane.b32.xlu0 %v1165, 95
      %v1267 = vpop.permute.xlu0 %1266
      %1268 = vrot.lane.b32.xlu0 %v1171, 95
      %v1269 = vpop.permute.xlu0 %1268
      %v1270 = vsel %vm722, %v1265, %v1267
      %v1271 = vsel %vm722, %v1267, %v1269
      %1277 = vrot.lane.b32.xlu0 %v1187, 94
      %v1278 = vpop.permute.xlu0 %1277
      %1279 = vrot.lane.b32.xlu0 %v1188, 94
      %v1280 = vpop.permute.xlu0 %1279
      %1281 = vrot.lane.b32.xlu0 %v1189, 94
      %v1282 = vpop.permute.xlu0 %1281
      %v1283 = vsel %vm736, %v1278, %v1280
      %v1284 = vsel %vm736, %v1280, %v1282
      %1288 = vset.pattern.permute.xlu0 0
      %1289 = vperm.xlu0 %1288, %v1149
      %v1290 = vpop.permute.xlu0 %1289
      %1293 = vset.pattern.permute.xlu0 0
      %1294 = vperm.xlu0 %1293, %v1150
      %v1295 = vpop.permute.xlu0 %1294
      %v1299 = vunpack.c.l.b16 %v1146
      %v1300 = vunpack.c.h.b16 %v1146
      %v1301 = vunpack.c.l.b16 %v1147
      %v1302 = vunpack.c.h.b16 %v1147
      %v1303 = vpack.c.b16 %v1301, %v1299
      %v1304 = vpack.c.b16 %v1302, %v1300
      %v1307 = vsel %vm760, %v1304, 0
      %1309 = vmatpush.bf16.msra.mxu0 %v1270
      %1310 = vmatpush.bf16.msra.mxu0 %v1260
      %1311 = vmatpush.bf16.msra.mxu0 %v1247
      %1312 = vmatpush.bf16.msra.mxu0 %v1234
      %1313 = vmatpush.bf16.msra.mxu0 %v1224
      %1314 = vmatpush.bf16.msra.mxu0 %v1211
      %1315 = vmatpush.bf16.msra.mxu0 %v1198
      %1316 = vmatpush.bf16.msra.mxu0 %v1173
      %1317 = vmatmul.bf16.gmra.mxu0 %v1303
      %v1318 = vpop.f32.mrf.mxu0
      %v1319 = vadd.f32 %v1290, %v1318
      %v1320 = vpop.f32.mrf.mxu0
      %v1321 = vadd.f32 %v1295, %v1320
      %1322 = vdwg.mxu0
      %1323 = vmatpush.bf16.msra.mxu0 0
      %1324 = vmatpush.bf16.msra.mxu0 0
      %1325 = vmatpush.bf16.msra.mxu0 0
      %1326 = vmatpush.bf16.msra.mxu0 0
      %1327 = vmatpush.bf16.msra.mxu0 0
      %1328 = vmatpush.bf16.msra.mxu0 0
      %1329 = vmatpush.bf16.msra.mxu0 0
      %1330 = vmatpush.bf16.msra.mxu0 %v1283
      %1331 = vmatmul.bf16.gmra.mxu0 %v1307
      %v1332 = vpop.f32.mrf.mxu0
      %v1333 = vadd.f32 %v1319, %v1332
      %v1334 = vpop.f32.mrf.mxu0
      %v1335 = vadd.f32 %v1321, %v1334
      %1336 = vdwg.mxu0
      %1337 = vmatpush.bf16.msra.mxu0 %v1271
      %1338 = vmatpush.bf16.msra.mxu0 %v1261
      %1339 = vmatpush.bf16.msra.mxu0 %v1248
      %1340 = vmatpush.bf16.msra.mxu0 %v1235
      %1341 = vmatpush.bf16.msra.mxu0 %v1225
      %1342 = vmatpush.bf16.msra.mxu0 %v1212
      %1343 = vmatpush.bf16.msra.mxu0 %v1199
      %1344 = vmatpush.bf16.msra.mxu0 %v1174
      %1345 = vmatmul.bf16.gmra.mxu0 %v1303
      %v1346 = vpop.f32.mrf.mxu0
      %v1347 = vadd.f32 %v1290, %v1346
      %v1348 = vpop.f32.mrf.mxu0
      %v1349 = vadd.f32 %v1295, %v1348
      %1350 = vdwg.mxu0
      %1351 = vmatpush.bf16.msra.mxu0 0
      %1352 = vmatpush.bf16.msra.mxu0 0
      %1353 = vmatpush.bf16.msra.mxu0 0
      %1354 = vmatpush.bf16.msra.mxu0 0
      %1355 = vmatpush.bf16.msra.mxu0 0
      %1356 = vmatpush.bf16.msra.mxu0 0
      %1357 = vmatpush.bf16.msra.mxu0 0
      %1358 = vmatpush.bf16.msra.mxu0 %v1284
      %1359 = vmatmul.bf16.gmra.mxu0 %v1307
      %v1360 = vpop.f32.mrf.mxu0
      %v1361 = vadd.f32 %v1347, %v1360
      %v1362 = vpop.f32.mrf.mxu0
      %v1363 = vadd.f32 %v1349, %v1362
      %1364 = vdwg.mxu0
      %v1365 = vmax.f32 %v1333, 0.0
      %v1366 = vmax.f32 %v1361, 0.0
      %v1367 = vmax.f32 %v1335, 0.0
      %v1368 = vmax.f32 %v1363, 0.0
      %s1369 = scalar_lea.vmem %s3, 16
      %v1370 = vld [vmem:[%s1369] sm:$0xff]
      %v1371 = vld [vmem:[%s1369 + $0x8] sm:$0xff]
      %s1372 = scalar_lea.vmem %s4, 16
      %v1373 = vld [vmem:[%s1372] sm:$0xff]
      %v1374 = vld [vmem:[%s1372 + $0x8] sm:$0xff]
      %v1375 = vpack.c.bf16 %v1366, %v1365
      %v1376 = vpack.c.bf16 %v1368, %v1367
      %v1379 = vunpack.c.l.b16 %v1375
      %v1380 = vunpack.c.h.b16 %v1375
      %v1381 = vunpack.c.l.b16 %v1376
      %v1382 = vunpack.c.h.b16 %v1376
      %v1383 = vpack.c.b16 %v1381, %v1379
      %v1384 = vpack.c.b16 %v1382, %v1380
      %1385 = vrot.lane.b32.xlu0 %v1383, 17
      %v1386 = vpop.permute.xlu0 %1385
      %1387 = vrot.lane.b32.xlu0 %v1384, 17
      %v1388 = vpop.permute.xlu0 %1387
      %v1389 = vsel %vm443, %v1386, %v1388
      %v1392 = vsel %vm446, 0, %v1386
      %v1395 = vsel %vm446, %v1388, 0
      %v1397 = vsel %vm468, %v1392, 0
      %v1398 = vsel %vm475, %v1389, 0
      %v1399 = vsel %vm498, %v1392, 0
      %v1400 = vsel %vm505, %v1389, 0
      %v1401 = vsel %vm512, %v1395, 0
      %v1402 = vsel %vm528, %v1392, 0
      %v1403 = vsel %vm535, %v1389, 0
      %v1404 = vsel %vm542, %v1395, 0
      %v1405 = vsel %vm558, %v1392, 0
      %v1406 = vsel %vm565, %v1389, 0
      %v1407 = vsel %vm572, %v1395, 0
      %v1408 = vsel %vm588, %v1392, 0
      %v1409 = vsel %vm595, %v1389, 0
      %v1410 = vsel %vm602, %v1395, 0
      %v1411 = vsel %vm618, %v1392, 0
      %v1412 = vsel %vm625, %v1389, 0
      %v1413 = vsel %vm632, %v1395, 0
      %1416 = vrot.lane.b32.xlu0 %v1392, 127
      %v1417 = vpop.permute.xlu0 %1416
      %1418 = vrot.lane.b32.xlu0 %v1389, 127
      %v1419 = vpop.permute.xlu0 %1418
      %1420 = vrot.lane.b32.xlu0 %v1395, 127
      %v1421 = vpop.permute.xlu0 %1420
      %v1422 = vsel %vm644, %v1417, %v1419
      %v1423 = vsel %vm644, %v1419, %v1421
      %1429 = vrot.lane.b32.xlu0 %v1399, 126
      %v1430 = vpop.permute.xlu0 %1429
      %1431 = vrot.lane.b32.xlu0 %v1400, 126
      %v1432 = vpop.permute.xlu0 %1431
      %1433 = vrot.lane.b32.xlu0 %v1401, 126
      %v1434 = vpop.permute.xlu0 %1433
      %v1435 = vsel %vm658, %v1430, %v1432
      %v1436 = vsel %vm658, %v1432, %v1434
      %1442 = vrot.lane.b32.xlu0 %v1402, 112
      %v1443 = vpop.permute.xlu0 %1442
      %1444 = vrot.lane.b32.xlu0 %v1403, 112
      %v1445 = vpop.permute.xlu0 %1444
      %1446 = vrot.lane.b32.xlu0 %v1404, 112
      %v1447 = vpop.permute.xlu0 %1446
      %v1448 = vsel %vm672, %v1443, %v1445
      %v1449 = vsel %vm672, %v1445, %v1447
      %1452 = vrot.lane.b32.xlu0 %v1392, 111
      %v1453 = vpop.permute.xlu0 %1452
      %1454 = vrot.lane.b32.xlu0 %v1389, 111
      %v1455 = vpop.permute.xlu0 %1454
      %1456 = vrot.lane.b32.xlu0 %v1395, 111
      %v1457 = vpop.permute.xlu0 %1456
      %v1458 = vsel %vm683, %v1453, %v1455
      %v1459 = vsel %vm683, %v1455, %v1457
      %1465 = vrot.lane.b32.xlu0 %v1405, 110
      %v1466 = vpop.permute.xlu0 %1465
      %1467 = vrot.lane.b32.xlu0 %v1406, 110
      %v1468 = vpop.permute.xlu0 %1467
      %1469 = vrot.lane.b32.xlu0 %v1407, 110
      %v1470 = vpop.permute.xlu0 %1469
      %v1471 = vsel %vm697, %v1466, %v1468
      %v1472 = vsel %vm697, %v1468, %v1470
      %1478 = vrot.lane.b32.xlu0 %v1408, 96
      %v1479 = vpop.permute.xlu0 %1478
      %1480 = vrot.lane.b32.xlu0 %v1409, 96
      %v1481 = vpop.permute.xlu0 %1480
      %1482 = vrot.lane.b32.xlu0 %v1410, 96
      %v1483 = vpop.permute.xlu0 %1482
      %v1484 = vsel %vm711, %v1479, %v1481
      %v1485 = vsel %vm711, %v1481, %v1483
      %1488 = vrot.lane.b32.xlu0 %v1392, 95
      %v1489 = vpop.permute.xlu0 %1488
      %1490 = vrot.lane.b32.xlu0 %v1389, 95
      %v1491 = vpop.permute.xlu0 %1490
      %1492 = vrot.lane.b32.xlu0 %v1395, 95
      %v1493 = vpop.permute.xlu0 %1492
      %v1494 = vsel %vm722, %v1489, %v1491
      %v1495 = vsel %vm722, %v1491, %v1493
      %1501 = vrot.lane.b32.xlu0 %v1411, 94
      %v1502 = vpop.permute.xlu0 %1501
      %1503 = vrot.lane.b32.xlu0 %v1412, 94
      %v1504 = vpop.permute.xlu0 %1503
      %1505 = vrot.lane.b32.xlu0 %v1413, 94
      %v1506 = vpop.permute.xlu0 %1505
      %v1507 = vsel %vm736, %v1502, %v1504
      %v1508 = vsel %vm736, %v1504, %v1506
      %1512 = vset.pattern.permute.xlu0 0
      %1513 = vperm.xlu0 %1512, %v1373
      %v1514 = vpop.permute.xlu0 %1513
      %1517 = vset.pattern.permute.xlu0 0
      %1518 = vperm.xlu0 %1517, %v1374
      %v1519 = vpop.permute.xlu0 %1518
      %v1523 = vunpack.c.l.b16 %v1370
      %v1524 = vunpack.c.h.b16 %v1370
      %v1525 = vunpack.c.l.b16 %v1371
      %v1526 = vunpack.c.h.b16 %v1371
      %v1527 = vpack.c.b16 %v1525, %v1523
      %v1528 = vpack.c.b16 %v1526, %v1524
      %v1531 = vsel %vm760, %v1528, 0
      %1533 = vmatpush.bf16.msra.mxu0 %v1494
      %1534 = vmatpush.bf16.msra.mxu0 %v1484
      %1535 = vmatpush.bf16.msra.mxu0 %v1471
      %1536 = vmatpush.bf16.msra.mxu0 %v1458
      %1537 = vmatpush.bf16.msra.mxu0 %v1448
      %1538 = vmatpush.bf16.msra.mxu0 %v1435
      %1539 = vmatpush.bf16.msra.mxu0 %v1422
      %1540 = vmatpush.bf16.msra.mxu0 %v1397
      %1541 = vmatmul.bf16.gmra.mxu0 %v1527
      %v1542 = vpop.f32.mrf.mxu0
      %v1543 = vadd.f32 %v1514, %v1542
      %v1544 = vpop.f32.mrf.mxu0
      %v1545 = vadd.f32 %v1519, %v1544
      %1546 = vdwg.mxu0
      %1547 = vmatpush.bf16.msra.mxu0 0
      %1548 = vmatpush.bf16.msra.mxu0 0
      %1549 = vmatpush.bf16.msra.mxu0 0
      %1550 = vmatpush.bf16.msra.mxu0 0
      %1551 = vmatpush.bf16.msra.mxu0 0
      %1552 = vmatpush.bf16.msra.mxu0 0
      %1553 = vmatpush.bf16.msra.mxu0 0
      %1554 = vmatpush.bf16.msra.mxu0 %v1507
      %1555 = vmatmul.bf16.gmra.mxu0 %v1531
      %v1556 = vpop.f32.mrf.mxu0
      %v1557 = vadd.f32 %v1543, %v1556
      %v1558 = vpop.f32.mrf.mxu0
      %v1559 = vadd.f32 %v1545, %v1558
      %1560 = vdwg.mxu0
      %1561 = vmatpush.bf16.msra.mxu0 %v1495
      %1562 = vmatpush.bf16.msra.mxu0 %v1485
      %1563 = vmatpush.bf16.msra.mxu0 %v1472
      %1564 = vmatpush.bf16.msra.mxu0 %v1459
      %1565 = vmatpush.bf16.msra.mxu0 %v1449
      %1566 = vmatpush.bf16.msra.mxu0 %v1436
      %1567 = vmatpush.bf16.msra.mxu0 %v1423
      %1568 = vmatpush.bf16.msra.mxu0 %v1398
      %1569 = vmatmul.bf16.gmra.mxu0 %v1527
      %v1570 = vpop.f32.mrf.mxu0
      %v1571 = vadd.f32 %v1514, %v1570
      %v1572 = vpop.f32.mrf.mxu0
      %v1573 = vadd.f32 %v1519, %v1572
      %1574 = vdwg.mxu0
      %1575 = vmatpush.bf16.msra.mxu0 0
      %1576 = vmatpush.bf16.msra.mxu0 0
      %1577 = vmatpush.bf16.msra.mxu0 0
      %1578 = vmatpush.bf16.msra.mxu0 0
      %1579 = vmatpush.bf16.msra.mxu0 0
      %1580 = vmatpush.bf16.msra.mxu0 0
      %1581 = vmatpush.bf16.msra.mxu0 0
      %1582 = vmatpush.bf16.msra.mxu0 %v1508
      %1583 = vmatmul.bf16.gmra.mxu0 %v1531
      %v1584 = vpop.f32.mrf.mxu0
      %v1585 = vadd.f32 %v1571, %v1584
      %v1586 = vpop.f32.mrf.mxu0
      %v1587 = vadd.f32 %v1573, %v1586
      %1588 = vdwg.mxu0
      %v1589 = vadd.f32 %v1557, %v1585
      %1590 = vadd.xlane.f32.xlu0 %v1589
      %v1591 = vpop.xlane.xlu0 %1590
      %v1592 = vadd.f32 %v1559, %v1587
      %1593 = vadd.xlane.f32.xlu0 %v1592
      %v1594 = vpop.xlane.xlu0 %1593
      %v1595 = vmul.f32 %v1591, %v1054
      %v1596 = vmul.f32 %v1594, %v1054
      %s1597 = scalar_lea.vmem %s5, 16
      %v1598 = vld [vmem:[%s1597] sm:$0xff]
      %v1599 = vld [vmem:[%s1597 + $0x8] sm:$0xff]
      %v1600 = vmul.f32 %v1598, %v1595
      %v1601 = vmul.f32 %v1599, %v1596
      %v1602 = vsel %vm1061, %v1600, 0.0
      %v1603 = vsel %vm1061, %v1601, 0.0
      %v1604 = vadd.f32 %v1602, %v1603
      %v1605 = vrot.slane %v1604, 4
      %v1606 = vadd.f32 %v1604, %v1605
      %v1607 = vrot.slane %v1606, 2
      %v1608 = vadd.f32 %v1606, %v1607
      %v1609 = vrot.slane %v1608, 1
      %v1610 = vadd.f32 %v1608, %v1609
      %s1611 = scalar_lea.vmem %s6, 1
      %v1612 = vld [vmem:[%s1611] sm:$0x1]
      %v1613 = vadd.f32 %v1610, %v1612
      %v1614 = vmax.f32 %v1613, 0.0
      %s1615 = scalar_lea.vmem %s7, 16
      %v1616 = vld [vmem:[%s1615] sm:$0xff]
      %v1617 = vld [vmem:[%s1615 + $0x8] sm:$0xff]
      %v1618 = vperm.slane %v1614, 0
      %v1619 = vmul.f32 %v1616, %v1618
      %v1620 = vmul.f32 %v1617, %v1618
      %v1621 = vsel %vm1061, %v1619, 0.0
      %1622 = vadd.xlane.f32.xlu0 %v1621
      %v1623 = vpop.xlane.xlu0 %1622
      %v1624 = vsel %vm1061, %v1620, 0.0
      %1625 = vadd.xlane.f32.xlu0 %v1624
      %v1626 = vpop.xlane.xlu0 %1625
      %s1627 = scalar_lea.vmem %s8, 16
      %v1628 = vld [vmem:[%s1627] sm:$0xff]
      %v1629 = vld [vmem:[%s1627 + $0x8] sm:$0xff]
      %v1630 = vadd.f32 %v1623, %v1628
      %v1631 = vadd.f32 %v1626, %v1629
      %v1632 = vxor.u32 %v1630, 2147483648
      %v1633 = vxor.u32 %v1631, 2147483648
      %v1634 = vmul.f32 %v1632, 1.442695
      %v1635 = vpow.pop %v1634
      %v1636 = vmul.f32 %v1633, 1.442695
      %v1637 = vpow.pop %v1636
      %v1638 = vadd.f32 %v1635, 1.0
      %v1639 = vadd.f32 %v1637, 1.0
      %v1640 = vrcp.pop %v1638
      %v1641 = vmul.f32 %v1638, %v1640
      %v1642 = vsub.f32 1.0, %v1641
      %v1643 = vmul.f32 %v1640, %v1642
      %v1644 = vadd.f32 %v1640, %v1643
      %vm1645 = vweird.f32 %v1638
      %vm1646 = vweird.f32 %v1640
      %vm1647 = vmor %vm1645, %vm1646
      %v1648 = vsel %vm1647, %v1640, %v1644
      %v1649 = vand.u32 2147483647, %v1638
      %vm1650 = vcmp.eq.f32.partialorder %v1649, 8.507059e+37
      %v1651 = vand.u32 %v1638, 2147483648
      %v1652 = vor.u32 1.1754944e-38, %v1651
      %v1653 = vsel %vm1650, %v1652, %v1648
      %v1654 = vmul.f32 1.0, %v1653
      %v1655 = vrcp.pop %v1639
      %v1656 = vmul.f32 %v1639, %v1655
      %v1657 = vsub.f32 1.0, %v1656
      %v1658 = vmul.f32 %v1655, %v1657
      %v1659 = vadd.f32 %v1655, %v1658
      %vm1660 = vweird.f32 %v1639
      %vm1661 = vweird.f32 %v1655
      %vm1662 = vmor %vm1660, %vm1661
      %v1663 = vsel %vm1662, %v1655, %v1659
      %v1664 = vand.u32 2147483647, %v1639
      %vm1665 = vcmp.eq.f32.partialorder %v1664, 8.507059e+37
      %v1666 = vand.u32 %v1639, 2147483648
      %v1667 = vor.u32 1.1754944e-38, %v1666
      %v1668 = vsel %vm1665, %v1667, %v1663
      %v1669 = vmul.f32 1.0, %v1668
      %1671 = vset.pattern.permute.xlu0 0
      %1672 = vperm.xlu0 %1671, %v1654
      %v1673 = vpop.permute.xlu0 %1672
      %1676 = vset.pattern.permute.xlu0 0
      %1677 = vperm.xlu0 %1676, %v1669
      %v1678 = vpop.permute.xlu0 %1677
      %v1680 = vmul.f32 %v1557, %v1673
      %v1681 = vmul.f32 %v1585, %v1673
      %v1682 = vmul.f32 %v1559, %v1678
      %v1683 = vmul.f32 %v1587, %v1678
      %v1684 = vadd.f32 %v1680, %v1141
      %v1685 = vadd.f32 %v1681, %v1142
      %v1686 = vadd.f32 %v1682, %v1143
      %v1687 = vadd.f32 %v1683, %v1144
      %v1688 = vld [vmem:[%s9] sm:$0xff]
      %v1689 = vld [vmem:[%s9 + $0x8] sm:$0xff]
      %v1690 = vld [vmem:[%s10] sm:$0xff]
      %v1691 = vld [vmem:[%s10 + $0x8] sm:$0xff]
      %v1692 = vpack.c.bf16 %v1685, %v1684
      %v1693 = vpack.c.bf16 %v1687, %v1686
      %v1696 = vunpack.c.l.b16 %v1692
      %v1697 = vunpack.c.h.b16 %v1692
      %v1698 = vunpack.c.l.b16 %v1693
      %v1699 = vunpack.c.h.b16 %v1693
      %v1700 = vpack.c.b16 %v1698, %v1696
      %v1701 = vpack.c.b16 %v1699, %v1697
      %1702 = vrot.lane.b32.xlu0 %v1700, 17
      %v1703 = vpop.permute.xlu0 %1702
      %1704 = vrot.lane.b32.xlu0 %v1701, 17
      %v1705 = vpop.permute.xlu0 %1704
      %v1706 = vsel %vm443, %v1703, %v1705
      %v1709 = vsel %vm446, 0, %v1703
      %v1712 = vsel %vm446, %v1705, 0
      %v1714 = vsel %vm468, %v1709, 0
      %v1715 = vsel %vm475, %v1706, 0
      %v1716 = vsel %vm498, %v1709, 0
      %v1717 = vsel %vm505, %v1706, 0
      %v1718 = vsel %vm512, %v1712, 0
      %v1719 = vsel %vm528, %v1709, 0
      %v1720 = vsel %vm535, %v1706, 0
      %v1721 = vsel %vm542, %v1712, 0
      %v1722 = vsel %vm558, %v1709, 0
      %v1723 = vsel %vm565, %v1706, 0
      %v1724 = vsel %vm572, %v1712, 0
      %v1725 = vsel %vm588, %v1709, 0
      %v1726 = vsel %vm595, %v1706, 0
      %v1727 = vsel %vm602, %v1712, 0
      %v1728 = vsel %vm618, %v1709, 0
      %v1729 = vsel %vm625, %v1706, 0
      %v1730 = vsel %vm632, %v1712, 0
      %1733 = vrot.lane.b32.xlu0 %v1709, 127
      %v1734 = vpop.permute.xlu0 %1733
      %1735 = vrot.lane.b32.xlu0 %v1706, 127
      %v1736 = vpop.permute.xlu0 %1735
      %1737 = vrot.lane.b32.xlu0 %v1712, 127
      %v1738 = vpop.permute.xlu0 %1737
      %v1739 = vsel %vm644, %v1734, %v1736
      %v1740 = vsel %vm644, %v1736, %v1738
      %1746 = vrot.lane.b32.xlu0 %v1716, 126
      %v1747 = vpop.permute.xlu0 %1746
      %1748 = vrot.lane.b32.xlu0 %v1717, 126
      %v1749 = vpop.permute.xlu0 %1748
      %1750 = vrot.lane.b32.xlu0 %v1718, 126
      %v1751 = vpop.permute.xlu0 %1750
      %v1752 = vsel %vm658, %v1747, %v1749
      %v1753 = vsel %vm658, %v1749, %v1751
      %1759 = vrot.lane.b32.xlu0 %v1719, 112
      %v1760 = vpop.permute.xlu0 %1759
      %1761 = vrot.lane.b32.xlu0 %v1720, 112
      %v1762 = vpop.permute.xlu0 %1761
      %1763 = vrot.lane.b32.xlu0 %v1721, 112
      %v1764 = vpop.permute.xlu0 %1763
      %v1765 = vsel %vm672, %v1760, %v1762
      %v1766 = vsel %vm672, %v1762, %v1764
      %1769 = vrot.lane.b32.xlu0 %v1709, 111
      %v1770 = vpop.permute.xlu0 %1769
      %1771 = vrot.lane.b32.xlu0 %v1706, 111
      %v1772 = vpop.permute.xlu0 %1771
      %1773 = vrot.lane.b32.xlu0 %v1712, 111
      %v1774 = vpop.permute.xlu0 %1773
      %v1775 = vsel %vm683, %v1770, %v1772
      %v1776 = vsel %vm683, %v1772, %v1774
      %1782 = vrot.lane.b32.xlu0 %v1722, 110
      %v1783 = vpop.permute.xlu0 %1782
      %1784 = vrot.lane.b32.xlu0 %v1723, 110
      %v1785 = vpop.permute.xlu0 %1784
      %1786 = vrot.lane.b32.xlu0 %v1724, 110
      %v1787 = vpop.permute.xlu0 %1786
      %v1788 = vsel %vm697, %v1783, %v1785
      %v1789 = vsel %vm697, %v1785, %v1787
      %1795 = vrot.lane.b32.xlu0 %v1725, 96
      %v1796 = vpop.permute.xlu0 %1795
      %1797 = vrot.lane.b32.xlu0 %v1726, 96
      %v1798 = vpop.permute.xlu0 %1797
      %1799 = vrot.lane.b32.xlu0 %v1727, 96
      %v1800 = vpop.permute.xlu0 %1799
      %v1801 = vsel %vm711, %v1796, %v1798
      %v1802 = vsel %vm711, %v1798, %v1800
      %1805 = vrot.lane.b32.xlu0 %v1709, 95
      %v1806 = vpop.permute.xlu0 %1805
      %1807 = vrot.lane.b32.xlu0 %v1706, 95
      %v1808 = vpop.permute.xlu0 %1807
      %1809 = vrot.lane.b32.xlu0 %v1712, 95
      %v1810 = vpop.permute.xlu0 %1809
      %v1811 = vsel %vm722, %v1806, %v1808
      %v1812 = vsel %vm722, %v1808, %v1810
      %1818 = vrot.lane.b32.xlu0 %v1728, 94
      %v1819 = vpop.permute.xlu0 %1818
      %1820 = vrot.lane.b32.xlu0 %v1729, 94
      %v1821 = vpop.permute.xlu0 %1820
      %1822 = vrot.lane.b32.xlu0 %v1730, 94
      %v1823 = vpop.permute.xlu0 %1822
      %v1824 = vsel %vm736, %v1819, %v1821
      %v1825 = vsel %vm736, %v1821, %v1823
      %1829 = vset.pattern.permute.xlu0 0
      %1830 = vperm.xlu0 %1829, %v1690
      %v1831 = vpop.permute.xlu0 %1830
      %1834 = vset.pattern.permute.xlu0 0
      %1835 = vperm.xlu0 %1834, %v1691
      %v1836 = vpop.permute.xlu0 %1835
      %v1840 = vunpack.c.l.b16 %v1688
      %v1841 = vunpack.c.h.b16 %v1688
      %v1842 = vunpack.c.l.b16 %v1689
      %v1843 = vunpack.c.h.b16 %v1689
      %v1844 = vpack.c.b16 %v1842, %v1840
      %v1845 = vpack.c.b16 %v1843, %v1841
      %v1848 = vsel %vm760, %v1845, 0
      %1850 = vmatpush.bf16.msra.mxu0 %v1811
      %1851 = vmatpush.bf16.msra.mxu0 %v1801
      %1852 = vmatpush.bf16.msra.mxu0 %v1788
      %1853 = vmatpush.bf16.msra.mxu0 %v1775
      %1854 = vmatpush.bf16.msra.mxu0 %v1765
      %1855 = vmatpush.bf16.msra.mxu0 %v1752
      %1856 = vmatpush.bf16.msra.mxu0 %v1739
      %1857 = vmatpush.bf16.msra.mxu0 %v1714
      %1858 = vmatmul.bf16.gmra.mxu0 %v1844
      %v1859 = vpop.f32.mrf.mxu0
      %v1860 = vadd.f32 %v1831, %v1859
      %v1861 = vpop.f32.mrf.mxu0
      %v1862 = vadd.f32 %v1836, %v1861
      %1863 = vdwg.mxu0
      %1864 = vmatpush.bf16.msra.mxu0 0
      %1865 = vmatpush.bf16.msra.mxu0 0
      %1866 = vmatpush.bf16.msra.mxu0 0
      %1867 = vmatpush.bf16.msra.mxu0 0
      %1868 = vmatpush.bf16.msra.mxu0 0
      %1869 = vmatpush.bf16.msra.mxu0 0
      %1870 = vmatpush.bf16.msra.mxu0 0
      %1871 = vmatpush.bf16.msra.mxu0 %v1824
      %1872 = vmatmul.bf16.gmra.mxu0 %v1848
      %v1873 = vpop.f32.mrf.mxu0
      %v1874 = vadd.f32 %v1860, %v1873
      %v1875 = vpop.f32.mrf.mxu0
      %v1876 = vadd.f32 %v1862, %v1875
      %1877 = vdwg.mxu0
      %1878 = vmatpush.bf16.msra.mxu0 %v1812
      %1879 = vmatpush.bf16.msra.mxu0 %v1802
      %1880 = vmatpush.bf16.msra.mxu0 %v1789
      %1881 = vmatpush.bf16.msra.mxu0 %v1776
      %1882 = vmatpush.bf16.msra.mxu0 %v1766
      %1883 = vmatpush.bf16.msra.mxu0 %v1753
      %1884 = vmatpush.bf16.msra.mxu0 %v1740
      %1885 = vmatpush.bf16.msra.mxu0 %v1715
      %1886 = vmatmul.bf16.gmra.mxu0 %v1844
      %v1887 = vpop.f32.mrf.mxu0
      %v1888 = vadd.f32 %v1831, %v1887
      %v1889 = vpop.f32.mrf.mxu0
      %v1890 = vadd.f32 %v1836, %v1889
      %1891 = vdwg.mxu0
      %1892 = vmatpush.bf16.msra.mxu0 0
      %1893 = vmatpush.bf16.msra.mxu0 0
      %1894 = vmatpush.bf16.msra.mxu0 0
      %1895 = vmatpush.bf16.msra.mxu0 0
      %1896 = vmatpush.bf16.msra.mxu0 0
      %1897 = vmatpush.bf16.msra.mxu0 0
      %1898 = vmatpush.bf16.msra.mxu0 0
      %1899 = vmatpush.bf16.msra.mxu0 %v1825
      %1900 = vmatmul.bf16.gmra.mxu0 %v1848
      %v1901 = vpop.f32.mrf.mxu0
      %v1902 = vadd.f32 %v1888, %v1901
      %v1903 = vpop.f32.mrf.mxu0
      %v1904 = vadd.f32 %v1890, %v1903
      %1905 = vdwg.mxu0
      %v1906 = vadd.f32 %v1874, %v421
      %v1907 = vadd.f32 %v1902, %v422
      %v1908 = vadd.f32 %v1876, %v423
      %v1909 = vadd.f32 %v1904, %v424
      %1910 = vst [vmem:[%s386] sm:$0xff] %v1906
      %1911 = vst [vmem:[%s386 + $0x8] sm:$0xff] %v1907
      %1912 = vst [vmem:[%s386 + $0x10] sm:$0xff] %v1908
      %1913 = vst [vmem:[%s386 + $0x18] sm:$0xff] %v1909
      %p1914 = scmp.lt.s32.totalorder %s22, 1
      %s1915 = scalar_select %p1914, %s22, 1
      %s1916 = smul.addr %s1915, 4
      %s1917 = smul.addr %s1916, 8
      %s1918 = scalar_lea.vmem %s11, %s1917
      // Predicated region
      $region65: #{residual_group_forward.1} parent=63 // pred_check
        %p1919 = pneg %p276
      $region66: #{residual_group_forward.1} parent=63 // pred_check_branch
        %1921 = sbr.rel (%p1919) target = $region68
      $region67: #{residual_group_forward.1} parent=63 // pred_region
        _
      $region68: #{residual_group_forward.1} parent=63 // pred_fallthru
        _
    $region64: #{residual_group_forward.1} parent=5 // pred_fallthru
      _
    %p1922 = scmp.le.s32.totalorder 2, %s17
    // Predicated region
    $region69: #{residual_group_forward.1} parent=5 // pred_check
      %p1923 = pneg %p1922
    $region70: #{residual_group_forward.1} parent=5 // pred_check_branch
      %1925 = sbr.rel (%p1923) target = $region72
    $region71: #{residual_group_forward.1} parent=5 // pred_region
      %s1926 = ssub.s32 %s17, 2
      // Predicated region
      $region73: #{residual_group_forward.1} parent=71 // pred_check
        %p1927 = pneg %p282
      $region74: #{residual_group_forward.1} parent=71 // pred_check_branch
        %1929 = sbr.rel (%p1927) target = $region76
      $region75: #{residual_group_forward.1} parent=71 // pred_region
        %p1930 = scmp.lt.s32.totalorder %s23, 1
        %s1931 = scalar_select %p1930, %s23, 1
        %s1932 = smul.addr %s1931, 4
        %s1933 = smul.addr %s1932, 8
        %s1934 = scalar_lea.vmem %s11, %s1933
      $region76: #{residual_group_forward.1} parent=71 // pred_fallthru
        _
    $region72: #{residual_group_forward.1} parent=5 // pred_fallthru
      _
  $region6: #{residual_group_forward.1} parent=0 // loop_footer
    %s21 = sadd.s32 1, %s17
  $region7: #{residual_group_forward.1} parent=0 // loop_footer_branch
    %16 = sbr.rel target = $region3
  $region8: #{residual_group_forward.1} parent=0 // loop_exit
    _

</llo_original>
